<compile_context>
chip_gen: v7x
topology: tpu7x:2x2x1
jax: 0.10.0
libtpu: 0.0.40
codegen_flags: <defaults>
</compile_context>

<pallas_src>
import functools

import numpy as np

import jax
import jax.numpy as jnp
from jax.experimental import pallas as pl
from jax.experimental.pallas import tpu as pltpu

BN_EPS = 1e-5


def _round_up(x, m):
    return (x + m - 1) // m * m


# ----------------------------------------------------------------------------
# Fused Pallas kernel: one grid step == B images (batch folded into the lanes).
# ----------------------------------------------------------------------------
def _bottleneck_kernel(x_ref, mask_ref, w1_ref, w2_ref, w3_ref, b_ref, o_ref,
                       *, W, widthp, cout):
    # x_ref:    (Cin, LB)            activations, B images concatenated on the lane axis
    # mask_ref: (9, 1, LB)           per-tap zero-padding (halo) masks, tiled per image
    # w1_ref:   (widthp, Cin)        bf16, BN1 scale folded in
    # w2_ref:   (9, widthp, widthp)  bf16, BN2 scale folded in, one slab per 3x3 tap
    # w3_ref:   (cout, widthp)       bf16, BN3 scale folded in
    # b_ref:    (3, CP, 1)           f32 packed BN shifts for the three stages
    x = x_ref[...]                                      # (Cin, LB) f32
    LB = x.shape[-1]

    b1 = b_ref[0][:widthp]                              # (widthp, 1)
    b2 = b_ref[1][:widthp]
    b3 = b_ref[2][:cout]                                # (cout, 1)

    # ---- conv1 (1x1) + bn1(shift) + relu ------------------------------------
    y1 = jnp.dot(w1_ref[...], x.astype(jnp.bfloat16),
                 preferred_element_type=jnp.float32)
    y1 = jnp.maximum(y1 + b1, 0.0)                      # (widthp, LB) f32

    # ---- conv2 (3x3, pad=1) + bn2(shift) + relu ------------------------------
    # Nine accumulating per-tap matmuls (no im2col buffer).  Each tap is a lane
    # rotation of y1; the mask zeroes samples that would have come from the virtual
    # zero padding (and samples that wrapped across an image boundary on the packed
    # lane axis).  Elementwise work stays f32; operands cast to bf16 at the dot.
    acc = None
    k = 0
    for dy in (-1, 0, 1):
        for dx in (-1, 0, 1):
            off = dy * W + dx
            if off == 0:
                tap = y1
            else:
                tap = pltpu.roll(y1, shift=(-off) % LB, axis=1) * mask_ref[k]
            d = jnp.dot(w2_ref[k], tap.astype(jnp.bfloat16),
                        preferred_element_type=jnp.float32)
            acc = d if acc is None else acc + d
            k += 1
    y2 = jnp.maximum(acc + b2, 0.0)                     # (widthp, LB) f32

    # ---- conv3 (1x1) + bn3(shift) + residual + relu --------------------------
    y3 = jnp.dot(w3_ref[...], y2.astype(jnp.bfloat16),
                 preferred_element_type=jnp.float32)
    o_ref[...] = jnp.maximum(y3 + b3 + x, 0.0).astype(o_ref.dtype)


# ----------------------------------------------------------------------------
# Wrapper: BN folding, weight packing and the single pallas_call.
# ----------------------------------------------------------------------------
def _fold_bn(gamma, beta, mean, var):
    scale = gamma / jnp.sqrt(var + BN_EPS)
    shift = beta - mean * scale
    return scale, shift


def _halo_masks(H, W, images_per_block):
    """(9, 1, B*H*W) f32 masks: 1 where the rolled sample is in-bounds, 0 in the halo."""
    masks = np.zeros((9, 1, H * W), np.float32)
    k = 0
    for dy in (-1, 0, 1):
        for dx in (-1, 0, 1):
            m = np.zeros((H, W), np.float32)
            h0, h1 = max(0, -dy), min(H, H - dy)
            w0, w1 = max(0, -dx), min(W, W - dx)
            m[h0:h1, w0:w1] = 1.0
            masks[k, 0] = m.reshape(H * W)
            k += 1
    return jnp.asarray(np.tile(masks, (1, 1, images_per_block)))


def _images_per_block(N, HW, lane_target=1024):
    """Largest divisor of N whose lane extent is tile-legal and within the lane target."""
    valid = [d for d in range(1, N + 1)
             if N % d == 0 and (d == N or (d * HW) % 128 == 0)]
    within = [d for d in valid if d * HW <= max(lane_target, HW)]
    return max(within) if within else min(valid)


def bottleneck_forward(x_nchw, params):
    """Full BottleneckBlock forward (stride=1, groups=1, dilation=1, no downsample)."""
    (w1, bn1), (w2, bn2), (w3, bn3) = params
    N, Cin, H, W = x_nchw.shape
    width = int(w1.shape[0])
    Cout = int(w3.shape[0])
    assert Cout == Cin, "downsample=None path requires in_features == out_features*expansion"
    HW = H * W
    widthp = _round_up(width, 16)        # bf16 packs 16 sublanes per vreg
    pw = widthp - width

    # Fold the BatchNorm scale into the conv-weight output rows (f32), keep shifts.
    s1, b1 = _fold_bn(*bn1)
    s2, b2 = _fold_bn(*bn2)
    s3, b3 = _fold_bn(*bn3)

    w1m = jnp.pad(s1[:, None] * w1[:, :, 0, 0], ((0, pw), (0, 0)))           # (widthp, Cin)
    w2s = jnp.stack([
        jnp.pad(s2[:, None] * w2[:, :, kh, kw], ((0, pw), (0, pw)))
        for kh in range(3) for kw in range(3)])                              # (9, widthp, widthp)
    w3m = jnp.pad(s3[:, None] * w3[:, :, 0, 0], ((0, 0), (0, pw)))           # (Cout, widthp)
    w1m, w2s, w3m = (w.astype(jnp.bfloat16) for w in (w1m, w2s, w3m))

    # Pack the three (C,) BN shifts into one operand (fewer input streams).
    cp = max(widthp, _round_up(Cout, 8))
    pad_to = lambda v: jnp.pad(v, (0, cp - v.shape[0]))
    bias = jnp.stack([pad_to(b1), pad_to(b2), pad_to(b3)]).reshape(3, cp, 1)

    # Batch folded into the lane axis: (N, Cin, H, W) -> (Cin, N*HW), blocked by B images.
    B = _images_per_block(N, HW)
    LB = B * HW
    masks = _halo_masks(H, W, B)                                             # (9, 1, LB)
    x2 = x_nchw.reshape(N, Cin, HW).transpose(1, 0, 2).reshape(Cin, N * HW)

    const = lambda a: pl.BlockSpec(a.shape, lambda n, _nd=a.ndim: (0,) * _nd)

    # Scoped-VMEM budget from the actual block footprint (+ headroom), instead of the
    # 16/32 MiB default scoped limit.
    def nbytes(*arrs):
        return sum(int(np.prod(a.shape)) * a.dtype.itemsize for a in arrs)
    block_bytes = (Cin + Cout) * LB * 4                     # activation in/out blocks
    const_bytes = nbytes(masks, w1m, w2s, w3m, bias)
    scratch_bytes = 4 * widthp * LB * 4                     # y1 / taps / acc / y2
    vmem_limit = int(min(100 * 2**20,
                         max(16 * 2**20,
                             2 * (block_bytes + const_bytes) + scratch_bytes + 4 * 2**20)))

    out = pl.pallas_call(
        functools.partial(_bottleneck_kernel, W=W, widthp=widthp, cout=Cout),
        out_shape=jax.ShapeDtypeStruct((Cout, N * HW), x_nchw.dtype),
        grid=(N // B,),
        in_specs=[
            pl.BlockSpec((Cin, LB), lambda n: (0, n)),      # activations, lane-blocked
            const(masks), const(w1m), const(w2s), const(w3m), const(bias),
        ],
        out_specs=pl.BlockSpec((Cout, LB), lambda n: (0, n)),   # lane-dense output
        compiler_params=pltpu.CompilerParams(
            dimension_semantics=("parallel",),              # batch-lane axis -> megacore
            vmem_limit_bytes=vmem_limit,
        ),
    )(x2, masks, w1m, w2s, w3m, bias)
    return out.reshape(Cout, N, HW).transpose(1, 0, 2).reshape(N, Cout, H, W)


# ----------------------------------------------------------------------------
# Pure-JAX reference (for correctness check)
# ----------------------------------------------------------------------------
def ref_forward(x_nchw, params):
    (w1, bn1), (w2, bn2), (w3, bn3) = params

    def conv(x, w_oihw, padding=0):
        return jax.lax.conv_general_dilated(
            x, w_oihw, window_strides=(1, 1),
            padding=[(padding, padding), (padding, padding)],
            dimension_numbers=("NCHW", "OIHW", "NCHW"))

    def bn(x, p):
        g, b, m, v = (t.reshape(1, -1, 1, 1) for t in p)
        return (x - m) / jnp.sqrt(v + BN_EPS) * g + b

    identity = x_nchw
    x = jax.nn.relu(bn(conv(x_nchw, w1), bn1))
    x = jax.nn.relu(bn(conv(x, w2, padding=1), bn2))
    x = bn(conv(x, w3), bn3)
    return jax.nn.relu(x + identity)


# ----------------------------------------------------------------------------
if __name__ == "__main__":
    key = jax.random.PRNGKey(0)
    keys = jax.random.split(key, 8)

    # BottleneckBlock(in_features=16, out_features=4): width=4, out channels=16
    # -> residual add is shape-compatible with downsample=None.
    N, H, W = 2, 16, 16
    out_features, expansion = 4, 4
    in_features = out_features * expansion          # 16
    width = out_features                            # base_width=64, groups=1

    # Conv weights in PyTorch OIHW layout (bias=False).
    w1 = 0.1 * jax.random.normal(keys[0], (width, in_features, 1, 1), jnp.float32)
    w2 = 0.1 * jax.random.normal(keys[1], (width, width, 3, 3), jnp.float32)
    w3 = 0.1 * jax.random.normal(keys[2], (in_features, width, 1, 1), jnp.float32)

    def bn_params(k, c):
        k1, k2, k3, k4 = jax.random.split(k, 4)
        gamma = 1.0 + 0.1 * jax.random.normal(k1, (c,), jnp.float32)
        beta = 0.1 * jax.random.normal(k2, (c,), jnp.float32)
        mean = 0.1 * jax.random.normal(k3, (c,), jnp.float32)
        var = 1.0 + 0.1 * jax.random.uniform(k4, (c,), jnp.float32)
        return gamma, beta, mean, var

    params = (
        (w1, bn_params(keys[3], width)),
        (w2, bn_params(keys[4], width)),
        (w3, bn_params(keys[5], in_features)),
    )

    x = jax.random.normal(keys[6], (N, in_features, H, W), jnp.float32)  # NCHW input

    y = jax.block_until_ready(bottleneck_forward(x, params))
    y_ref = ref_forward(x, params)

    assert y.shape == (N, in_features, H, W)
    err = float(jnp.max(jnp.abs(y - y_ref)))
    # bf16 MXU operands with f32 accumulation: tolerance loosened vs the f32 reference.
    assert jnp.allclose(y, y_ref, atol=2e-2, rtol=2e-2), err

    print("KERNEL_OK")
</pallas_src>

<mosaic_0001>
module attributes {stable_mosaic.version = 11 : i64} {
  func.func @_bottleneck_kernel(%arg0: i32, %arg1: memref<16x512xf32, #tpu.memory_space<vmem>>, %arg2: memref<9x1x512xf32, #tpu.memory_space<vmem>>, %arg3: memref<16x16xbf16, #tpu.memory_space<vmem>>, %arg4: memref<9x16x16xbf16, #tpu.memory_space<vmem>>, %arg5: memref<16x16xbf16, #tpu.memory_space<vmem>>, %arg6: memref<3x16x1xf32, #tpu.memory_space<vmem>>, %arg7: memref<16x512xf32, #tpu.memory_space<vmem>>) attributes {dimension_semantics = [#tpu.dimension_semantics<parallel>], iteration_bounds = array<i64: 1>, scalar_prefetch = 0 : i64, scratch_operands = 0 : i64, tpu.core_type = #tpu.core_type<tc>, window_params = [{transform_indices = @transform_0, window_bounds = array<i64: 16, 512>}, {pipeline_mode = #tpu.pipeline_mode<synchronous>, transform_indices = @transform_1, window_bounds = array<i64: 9, 1, 512>}, {pipeline_mode = #tpu.pipeline_mode<synchronous>, transform_indices = @transform_2, window_bounds = array<i64: 16, 16>}, {pipeline_mode = #tpu.pipeline_mode<synchronous>, transform_indices = @transform_3, window_bounds = array<i64: 9, 16, 16>}, {pipeline_mode = #tpu.pipeline_mode<synchronous>, transform_indices = @transform_4, window_bounds = array<i64: 16, 16>}, {pipeline_mode = #tpu.pipeline_mode<synchronous>, transform_indices = @transform_5, window_bounds = array<i64: 3, 16, 1>}, {transform_indices = @transform_6, window_bounds = array<i64: 16, 512>}]} {
    %c0 = arith.constant 0 : index
    %c0_0 = arith.constant 0 : index
    %0 = vector.load %arg1[%c0, %c0_0] : memref<16x512xf32, #tpu.memory_space<vmem>>, vector<16x512xf32>
    %c0_1 = arith.constant 0 : index
    %c0_2 = arith.constant 0 : index
    %c0_3 = arith.constant 0 : index
    %1 = vector.load %arg6[%c0_1, %c0_2, %c0_3] : memref<3x16x1xf32, #tpu.memory_space<vmem>>, vector<1x16x1xf32>
    %2 = vector.shape_cast %1 : vector<1x16x1xf32> to vector<16x1xf32>
    %c1 = arith.constant 1 : index
    %c0_4 = arith.constant 0 : index
    %c0_5 = arith.constant 0 : index
    %3 = vector.load %arg6[%c1, %c0_4, %c0_5] : memref<3x16x1xf32, #tpu.memory_space<vmem>>, vector<1x16x1xf32>
    %4 = vector.shape_cast %3 : vector<1x16x1xf32> to vector<16x1xf32>
    %c2 = arith.constant 2 : index
    %c0_6 = arith.constant 0 : index
    %c0_7 = arith.constant 0 : index
    %5 = vector.load %arg6[%c2, %c0_6, %c0_7] : memref<3x16x1xf32, #tpu.memory_space<vmem>>, vector<1x16x1xf32>
    %6 = vector.shape_cast %5 : vector<1x16x1xf32> to vector<16x1xf32>
    %c0_8 = arith.constant 0 : index
    %c0_9 = arith.constant 0 : index
    %7 = vector.load %arg3[%c0_8, %c0_9] : memref<16x16xbf16, #tpu.memory_space<vmem>>, vector<16x16xbf16>
    %8 = arith.truncf %0 : vector<16x512xf32> to vector<16x512xbf16>
    %cst = arith.constant dense<0.000000e+00> : vector<16x512xf32>
    %9 = tpu.matmul %7, %8, %cst {dimension_numbers = #tpu.dot_dimension_numbers<[1], [0], [0], [1], [0, 0, 1, 1], [], []>} : vector<16x16xbf16>, vector<16x512xbf16>, vector<16x512xf32> -> vector<16x512xf32>
    %10 = vector.broadcast %2 : vector<16x1xf32> to vector<16x512xf32>
    %11 = arith.addf %9, %10 : vector<16x512xf32>
    %cst_10 = arith.constant 0.000000e+00 : f32
    %12 = vector.broadcast %cst_10 : f32 to vector<16x512xf32>
    %13 = arith.maximumf %11, %12 : vector<16x512xf32>
    %c17_i32 = arith.constant 17 : i32
    %14 = tpu.dynamic_rotate %13 by %c17_i32 dim 1 : vector<16x512xf32>, i32 -> vector<16x512xf32>
    %c0_11 = arith.constant 0 : index
    %c0_12 = arith.constant 0 : index
    %c0_13 = arith.constant 0 : index
    %15 = vector.load %arg2[%c0_11, %c0_12, %c0_13] : memref<9x1x512xf32, #tpu.memory_space<vmem>>, vector<1x1x512xf32>
    %16 = vector.shape_cast %15 : vector<1x1x512xf32> to vector<1x512xf32>
    %17 = vector.broadcast %16 : vector<1x512xf32> to vector<16x512xf32>
    %18 = arith.mulf %14, %17 : vector<16x512xf32>
    %c0_14 = arith.constant 0 : index
    %c0_15 = arith.constant 0 : index
    %c0_16 = arith.constant 0 : index
    %19 = vector.load %arg4[%c0_14, %c0_15, %c0_16] : memref<9x16x16xbf16, #tpu.memory_space<vmem>>, vector<1x16x16xbf16>
    %20 = vector.shape_cast %19 : vector<1x16x16xbf16> to vector<16x16xbf16>
    %21 = arith.truncf %18 : vector<16x512xf32> to vector<16x512xbf16>
    %cst_17 = arith.constant dense<0.000000e+00> : vector<16x512xf32>
    %22 = tpu.matmul %20, %21, %cst_17 {dimension_numbers = #tpu.dot_dimension_numbers<[1], [0], [0], [1], [0, 0, 1, 1], [], []>} : vector<16x16xbf16>, vector<16x512xbf16>, vector<16x512xf32> -> vector<16x512xf32>
    %c16_i32 = arith.constant 16 : i32
    %23 = tpu.dynamic_rotate %13 by %c16_i32 dim 1 : vector<16x512xf32>, i32 -> vector<16x512xf32>
    %c1_18 = arith.constant 1 : index
    %c0_19 = arith.constant 0 : index
    %c0_20 = arith.constant 0 : index
    %24 = vector.load %arg2[%c1_18, %c0_19, %c0_20] : memref<9x1x512xf32, #tpu.memory_space<vmem>>, vector<1x1x512xf32>
    %25 = vector.shape_cast %24 : vector<1x1x512xf32> to vector<1x512xf32>
    %26 = vector.broadcast %25 : vector<1x512xf32> to vector<16x512xf32>
    %27 = arith.mulf %23, %26 : vector<16x512xf32>
    %c1_21 = arith.constant 1 : index
    %c0_22 = arith.constant 0 : index
    %c0_23 = arith.constant 0 : index
    %28 = vector.load %arg4[%c1_21, %c0_22, %c0_23] : memref<9x16x16xbf16, #tpu.memory_space<vmem>>, vector<1x16x16xbf16>
    %29 = vector.shape_cast %28 : vector<1x16x16xbf16> to vector<16x16xbf16>
    %30 = arith.truncf %27 : vector<16x512xf32> to vector<16x512xbf16>
    %cst_24 = arith.constant dense<0.000000e+00> : vector<16x512xf32>
    %31 = tpu.matmul %29, %30, %cst_24 {dimension_numbers = #tpu.dot_dimension_numbers<[1], [0], [0], [1], [0, 0, 1, 1], [], []>} : vector<16x16xbf16>, vector<16x512xbf16>, vector<16x512xf32> -> vector<16x512xf32>
    %32 = arith.addf %22, %31 : vector<16x512xf32>
    %c15_i32 = arith.constant 15 : i32
    %33 = tpu.dynamic_rotate %13 by %c15_i32 dim 1 : vector<16x512xf32>, i32 -> vector<16x512xf32>
    %c2_25 = arith.constant 2 : index
    %c0_26 = arith.constant 0 : index
    %c0_27 = arith.constant 0 : index
    %34 = vector.load %arg2[%c2_25, %c0_26, %c0_27] : memref<9x1x512xf32, #tpu.memory_space<vmem>>, vector<1x1x512xf32>
    %35 = vector.shape_cast %34 : vector<1x1x512xf32> to vector<1x512xf32>
    %36 = vector.broadcast %35 : vector<1x512xf32> to vector<16x512xf32>
    %37 = arith.mulf %33, %36 : vector<16x512xf32>
    %c2_28 = arith.constant 2 : index
    %c0_29 = arith.constant 0 : index
    %c0_30 = arith.constant 0 : index
    %38 = vector.load %arg4[%c2_28, %c0_29, %c0_30] : memref<9x16x16xbf16, #tpu.memory_space<vmem>>, vector<1x16x16xbf16>
    %39 = vector.shape_cast %38 : vector<1x16x16xbf16> to vector<16x16xbf16>
    %40 = arith.truncf %37 : vector<16x512xf32> to vector<16x512xbf16>
    %cst_31 = arith.constant dense<0.000000e+00> : vector<16x512xf32>
    %41 = tpu.matmul %39, %40, %cst_31 {dimension_numbers = #tpu.dot_dimension_numbers<[1], [0], [0], [1], [0, 0, 1, 1], [], []>} : vector<16x16xbf16>, vector<16x512xbf16>, vector<16x512xf32> -> vector<16x512xf32>
    %42 = arith.addf %32, %41 : vector<16x512xf32>
    %c1_i32 = arith.constant 1 : i32
    %43 = tpu.dynamic_rotate %13 by %c1_i32 dim 1 : vector<16x512xf32>, i32 -> vector<16x512xf32>
    %c3 = arith.constant 3 : index
    %c0_32 = arith.constant 0 : index
    %c0_33 = arith.constant 0 : index
    %44 = vector.load %arg2[%c3, %c0_32, %c0_33] : memref<9x1x512xf32, #tpu.memory_space<vmem>>, vector<1x1x512xf32>
    %45 = vector.shape_cast %44 : vector<1x1x512xf32> to vector<1x512xf32>
    %46 = vector.broadcast %45 : vector<1x512xf32> to vector<16x512xf32>
    %47 = arith.mulf %43, %46 : vector<16x512xf32>
    %c3_34 = arith.constant 3 : index
    %c0_35 = arith.constant 0 : index
    %c0_36 = arith.constant 0 : index
    %48 = vector.load %arg4[%c3_34, %c0_35, %c0_36] : memref<9x16x16xbf16, #tpu.memory_space<vmem>>, vector<1x16x16xbf16>
    %49 = vector.shape_cast %48 : vector<1x16x16xbf16> to vector<16x16xbf16>
    %50 = arith.truncf %47 : vector<16x512xf32> to vector<16x512xbf16>
    %cst_37 = arith.constant dense<0.000000e+00> : vector<16x512xf32>
    %51 = tpu.matmul %49, %50, %cst_37 {dimension_numbers = #tpu.dot_dimension_numbers<[1], [0], [0], [1], [0, 0, 1, 1], [], []>} : vector<16x16xbf16>, vector<16x512xbf16>, vector<16x512xf32> -> vector<16x512xf32>
    %52 = arith.addf %42, %51 : vector<16x512xf32>
    %c4 = arith.constant 4 : index
    %c0_38 = arith.constant 0 : index
    %c0_39 = arith.constant 0 : index
    %53 = vector.load %arg4[%c4, %c0_38, %c0_39] : memref<9x16x16xbf16, #tpu.memory_space<vmem>>, vector<1x16x16xbf16>
    %54 = vector.shape_cast %53 : vector<1x16x16xbf16> to vector<16x16xbf16>
    %55 = arith.truncf %13 : vector<16x512xf32> to vector<16x512xbf16>
    %cst_40 = arith.constant dense<0.000000e+00> : vector<16x512xf32>
    %56 = tpu.matmul %54, %55, %cst_40 {dimension_numbers = #tpu.dot_dimension_numbers<[1], [0], [0], [1], [0, 0, 1, 1], [], []>} : vector<16x16xbf16>, vector<16x512xbf16>, vector<16x512xf32> -> vector<16x512xf32>
    %57 = arith.addf %52, %56 : vector<16x512xf32>
    %c511_i32 = arith.constant 511 : i32
    %58 = tpu.dynamic_rotate %13 by %c511_i32 dim 1 : vector<16x512xf32>, i32 -> vector<16x512xf32>
    %c5 = arith.constant 5 : index
    %c0_41 = arith.constant 0 : index
    %c0_42 = arith.constant 0 : index
    %59 = vector.load %arg2[%c5, %c0_41, %c0_42] : memref<9x1x512xf32, #tpu.memory_space<vmem>>, vector<1x1x512xf32>
    %60 = vector.shape_cast %59 : vector<1x1x512xf32> to vector<1x512xf32>
    %61 = vector.broadcast %60 : vector<1x512xf32> to vector<16x512xf32>
    %62 = arith.mulf %58, %61 : vector<16x512xf32>
    %c5_43 = arith.constant 5 : index
    %c0_44 = arith.constant 0 : index
    %c0_45 = arith.constant 0 : index
    %63 = vector.load %arg4[%c5_43, %c0_44, %c0_45] : memref<9x16x16xbf16, #tpu.memory_space<vmem>>, vector<1x16x16xbf16>
    %64 = vector.shape_cast %63 : vector<1x16x16xbf16> to vector<16x16xbf16>
    %65 = arith.truncf %62 : vector<16x512xf32> to vector<16x512xbf16>
    %cst_46 = arith.constant dense<0.000000e+00> : vector<16x512xf32>
    %66 = tpu.matmul %64, %65, %cst_46 {dimension_numbers = #tpu.dot_dimension_numbers<[1], [0], [0], [1], [0, 0, 1, 1], [], []>} : vector<16x16xbf16>, vector<16x512xbf16>, vector<16x512xf32> -> vector<16x512xf32>
    %67 = arith.addf %57, %66 : vector<16x512xf32>
    %c497_i32 = arith.constant 497 : i32
    %68 = tpu.dynamic_rotate %13 by %c497_i32 dim 1 : vector<16x512xf32>, i32 -> vector<16x512xf32>
    %c6 = arith.constant 6 : index
    %c0_47 = arith.constant 0 : index
    %c0_48 = arith.constant 0 : index
    %69 = vector.load %arg2[%c6, %c0_47, %c0_48] : memref<9x1x512xf32, #tpu.memory_space<vmem>>, vector<1x1x512xf32>
    %70 = vector.shape_cast %69 : vector<1x1x512xf32> to vector<1x512xf32>
    %71 = vector.broadcast %70 : vector<1x512xf32> to vector<16x512xf32>
    %72 = arith.mulf %68, %71 : vector<16x512xf32>
    %c6_49 = arith.constant 6 : index
    %c0_50 = arith.constant 0 : index
    %c0_51 = arith.constant 0 : index
    %73 = vector.load %arg4[%c6_49, %c0_50, %c0_51] : memref<9x16x16xbf16, #tpu.memory_space<vmem>>, vector<1x16x16xbf16>
    %74 = vector.shape_cast %73 : vector<1x16x16xbf16> to vector<16x16xbf16>
    %75 = arith.truncf %72 : vector<16x512xf32> to vector<16x512xbf16>
    %cst_52 = arith.constant dense<0.000000e+00> : vector<16x512xf32>
    %76 = tpu.matmul %74, %75, %cst_52 {dimension_numbers = #tpu.dot_dimension_numbers<[1], [0], [0], [1], [0, 0, 1, 1], [], []>} : vector<16x16xbf16>, vector<16x512xbf16>, vector<16x512xf32> -> vector<16x512xf32>
    %77 = arith.addf %67, %76 : vector<16x512xf32>
    %c496_i32 = arith.constant 496 : i32
    %78 = tpu.dynamic_rotate %13 by %c496_i32 dim 1 : vector<16x512xf32>, i32 -> vector<16x512xf32>
    %c7 = arith.constant 7 : index
    %c0_53 = arith.constant 0 : index
    %c0_54 = arith.constant 0 : index
    %79 = vector.load %arg2[%c7, %c0_53, %c0_54] : memref<9x1x512xf32, #tpu.memory_space<vmem>>, vector<1x1x512xf32>
    %80 = vector.shape_cast %79 : vector<1x1x512xf32> to vector<1x512xf32>
    %81 = vector.broadcast %80 : vector<1x512xf32> to vector<16x512xf32>
    %82 = arith.mulf %78, %81 : vector<16x512xf32>
    %c7_55 = arith.constant 7 : index
    %c0_56 = arith.constant 0 : index
    %c0_57 = arith.constant 0 : index
    %83 = vector.load %arg4[%c7_55, %c0_56, %c0_57] : memref<9x16x16xbf16, #tpu.memory_space<vmem>>, vector<1x16x16xbf16>
    %84 = vector.shape_cast %83 : vector<1x16x16xbf16> to vector<16x16xbf16>
    %85 = arith.truncf %82 : vector<16x512xf32> to vector<16x512xbf16>
    %cst_58 = arith.constant dense<0.000000e+00> : vector<16x512xf32>
    %86 = tpu.matmul %84, %85, %cst_58 {dimension_numbers = #tpu.dot_dimension_numbers<[1], [0], [0], [1], [0, 0, 1, 1], [], []>} : vector<16x16xbf16>, vector<16x512xbf16>, vector<16x512xf32> -> vector<16x512xf32>
    %87 = arith.addf %77, %86 : vector<16x512xf32>
    %c495_i32 = arith.constant 495 : i32
    %88 = tpu.dynamic_rotate %13 by %c495_i32 dim 1 : vector<16x512xf32>, i32 -> vector<16x512xf32>
    %c8 = arith.constant 8 : index
    %c0_59 = arith.constant 0 : index
    %c0_60 = arith.constant 0 : index
    %89 = vector.load %arg2[%c8, %c0_59, %c0_60] : memref<9x1x512xf32, #tpu.memory_space<vmem>>, vector<1x1x512xf32>
    %90 = vector.shape_cast %89 : vector<1x1x512xf32> to vector<1x512xf32>
    %91 = vector.broadcast %90 : vector<1x512xf32> to vector<16x512xf32>
    %92 = arith.mulf %88, %91 : vector<16x512xf32>
    %c8_61 = arith.constant 8 : index
    %c0_62 = arith.constant 0 : index
    %c0_63 = arith.constant 0 : index
    %93 = vector.load %arg4[%c8_61, %c0_62, %c0_63] : memref<9x16x16xbf16, #tpu.memory_space<vmem>>, vector<1x16x16xbf16>
    %94 = vector.shape_cast %93 : vector<1x16x16xbf16> to vector<16x16xbf16>
    %95 = arith.truncf %92 : vector<16x512xf32> to vector<16x512xbf16>
    %cst_64 = arith.constant dense<0.000000e+00> : vector<16x512xf32>
    %96 = tpu.matmul %94, %95, %cst_64 {dimension_numbers = #tpu.dot_dimension_numbers<[1], [0], [0], [1], [0, 0, 1, 1], [], []>} : vector<16x16xbf16>, vector<16x512xbf16>, vector<16x512xf32> -> vector<16x512xf32>
    %97 = arith.addf %87, %96 : vector<16x512xf32>
    %98 = vector.broadcast %4 : vector<16x1xf32> to vector<16x512xf32>
    %99 = arith.addf %97, %98 : vector<16x512xf32>
    %cst_65 = arith.constant 0.000000e+00 : f32
    %100 = vector.broadcast %cst_65 : f32 to vector<16x512xf32>
    %101 = arith.maximumf %99, %100 : vector<16x512xf32>
    %c0_66 = arith.constant 0 : index
    %c0_67 = arith.constant 0 : index
    %102 = vector.load %arg5[%c0_66, %c0_67] : memref<16x16xbf16, #tpu.memory_space<vmem>>, vector<16x16xbf16>
    %103 = arith.truncf %101 : vector<16x512xf32> to vector<16x512xbf16>
    %cst_68 = arith.constant dense<0.000000e+00> : vector<16x512xf32>
    %104 = tpu.matmul %102, %103, %cst_68 {dimension_numbers = #tpu.dot_dimension_numbers<[1], [0], [0], [1], [0, 0, 1, 1], [], []>} : vector<16x16xbf16>, vector<16x512xbf16>, vector<16x512xf32> -> vector<16x512xf32>
    %105 = vector.broadcast %6 : vector<16x1xf32> to vector<16x512xf32>
    %106 = arith.addf %104, %105 : vector<16x512xf32>
    %107 = arith.addf %106, %0 : vector<16x512xf32>
    %cst_69 = arith.constant 0.000000e+00 : f32
    %108 = vector.broadcast %cst_69 : f32 to vector<16x512xf32>
    %109 = arith.maximumf %107, %108 : vector<16x512xf32>
    %c0_70 = arith.constant 0 : index
    %c0_71 = arith.constant 0 : index
    %110 = vector.load %arg7[%c0_70, %c0_71] : memref<16x512xf32, #tpu.memory_space<vmem>>, vector<16x512xf32>
    tpu.vector_store %arg7[%c0_70, %c0_71], %109 {strides = array<i32>} : memref<16x512xf32, #tpu.memory_space<vmem>>, vector<16x512xf32>,
    return
  }
  func.func @transform_0(%arg0: i32) -> (i32, i32) {
    %c0_i32 = arith.constant 0 : i32
    %c0_i32_0 = arith.constant 0 : i32
    return %c0_i32, %arg0 : i32, i32
  }
  func.func @transform_1(%arg0: i32) -> (i32, i32, i32) {
    %c0_i32 = arith.constant 0 : i32
    %c0_i32_0 = arith.constant 0 : i32
    %c0_i32_1 = arith.constant 0 : i32
    %c0_i32_2 = arith.constant 0 : i32
    return %c0_i32, %c0_i32_0, %c0_i32_1 : i32, i32, i32
  }
  func.func @transform_2(%arg0: i32) -> (i32, i32) {
    %c0_i32 = arith.constant 0 : i32
    %c0_i32_0 = arith.constant 0 : i32
    %c0_i32_1 = arith.constant 0 : i32
    return %c0_i32, %c0_i32_0 : i32, i32
  }
  func.func @transform_3(%arg0: i32) -> (i32, i32, i32) {
    %c0_i32 = arith.constant 0 : i32
    %c0_i32_0 = arith.constant 0 : i32
    %c0_i32_1 = arith.constant 0 : i32
    %c0_i32_2 = arith.constant 0 : i32
    return %c0_i32, %c0_i32_0, %c0_i32_1 : i32, i32, i32
  }
  func.func @transform_4(%arg0: i32) -> (i32, i32) {
    %c0_i32 = arith.constant 0 : i32
    %c0_i32_0 = arith.constant 0 : i32
    %c0_i32_1 = arith.constant 0 : i32
    return %c0_i32, %c0_i32_0 : i32, i32
  }
  func.func @transform_5(%arg0: i32) -> (i32, i32, i32) {
    %c0_i32 = arith.constant 0 : i32
    %c0_i32_0 = arith.constant 0 : i32
    %c0_i32_1 = arith.constant 0 : i32
    %c0_i32_2 = arith.constant 0 : i32
    return %c0_i32, %c0_i32_0, %c0_i32_1 : i32, i32, i32
  }
  func.func @transform_6(%arg0: i32) -> (i32, i32) {
    %c0_i32 = arith.constant 0 : i32
    %c0_i32_0 = arith.constant 0 : i32
    return %c0_i32, %arg0 : i32, i32
  }
}

</mosaic_0001>

<llo_original>
// kernel: tpu_custom_call.1
$region0: #{tpu_custom_call.1}
  #allocation0 [shape = 'u32[]', space=smem, size = 0x4, offset = 0x4, fixed_abs, tag = 'smem constant byte address 0x4 - core index']
  #allocation1 [shape = 'u32[144,128]{1,0:T(1,128)}', space=vmem, size = 0x12000, scoped, tag = 'internal scratch']
  %s0 = inlined_call_operand.hbm [shape: f32[16,512], index: 0, kind: input, shape index: {}]
  %s1 = inlined_call_operand.vmem [shape: f32[9,1,512], index: 1, kind: input, shape index: {}]
  %s2 = inlined_call_operand.vmem [shape: bf16[16,16], index: 2, kind: input, shape index: {}]
  %s3 = inlined_call_operand.hbm [shape: bf16[9,16,16], index: 3, kind: input, shape index: {}]
  %s4 = inlined_call_operand.vmem [shape: bf16[16,16], index: 4, kind: input, shape index: {}]
  %s5 = inlined_call_operand.vmem [shape: f32[3,16,1], index: 5, kind: input, shape index: {}]
  %s6 = inlined_call_operand.hbm [shape: f32[16,512], index: 6, kind: output, shape index: {}]
  %s7 = sld [smem:[#allocation0]]
  $region42: #{tpu_custom_call.1} parent=0
    _
  %s9 = ssub.s32 1, %s7
  %s10 = scalar_select 0, %s9, %s7
  $region1: #{tpu_custom_call.1} parent=0
    #allocation2 [shape = 'u8[32768]{0}', space=vmem, size = 0x8000, scoped, tag = 'input window, operand 0, single buffered']
    #allocation3 [shape = 's32[1]{0}', space=sflag, size = 0x4, scoped, tag = 'scoped memory for tpu_custom_call.1']
    #allocation4 [shape = 's32[1]{0}', space=sflag, size = 0x4, scoped, tag = 'scoped memory for tpu_custom_call.1']
    #allocation5 [shape = 'u8[36864]{0}', space=vmem, size = 0x9000, scoped, tag = 'input window, operand 3, single buffered']
    #allocation6 [shape = 's32[1]{0}', space=sflag, size = 0x4, scoped, tag = 'scoped memory for tpu_custom_call.1']
    #allocation7 [shape = 'u8[32768]{0}', space=vmem, size = 0x8000, scoped, tag = 'output window, operand 0, single buffered']
    %11 = vsyncpa [#allocation3], 0
    %12 = vsyncpa [#allocation6], 0
    %13 = vsyncpa [#allocation4], 0
    // Predicated region
    $region2: #{tpu_custom_call.1} parent=1 // pred_check
      _
    $region3: #{tpu_custom_call.1} parent=1 // pred_check_branch
      %15 = sbr.rel (0) target = $region5
    $region4: #{tpu_custom_call.1} parent=1 // pred_region
      %s17 = ssub.s32 1024, 1024
      %18 = vsyncadd [#allocation3], %s17
      %s19 = sshll.u32 [#allocation2], 4
      %s20 = int_to_ptr.vmem [resolvable:$true] %s19
      %25 = dma.hbm_to_vmem [thread:$0]  %s0, 1024, %s20, [#allocation3], 512, 512, 32
    $region5: #{tpu_custom_call.1} parent=1 // pred_fallthru
      _
    // Predicated region
    $region6: #{tpu_custom_call.1} parent=1 // pred_check
      _
    $region7: #{tpu_custom_call.1} parent=1 // pred_check_branch
      %27 = sbr.rel (0) target = $region9
    $region8: #{tpu_custom_call.1} parent=1 // pred_region
      _
    $region9: #{tpu_custom_call.1} parent=1 // pred_fallthru
      _
    // Predicated region
    $region10: #{tpu_custom_call.1} parent=1 // pred_check
      _
    $region11: #{tpu_custom_call.1} parent=1 // pred_check_branch
      %29 = sbr.rel (0) target = $region13
    $region12: #{tpu_custom_call.1} parent=1 // pred_region
      _
    $region13: #{tpu_custom_call.1} parent=1 // pred_fallthru
      _
    // Predicated region
    $region14: #{tpu_custom_call.1} parent=1 // pred_check
      _
    $region15: #{tpu_custom_call.1} parent=1 // pred_check_branch
      %31 = sbr.rel (0) target = $region17
    $region16: #{tpu_custom_call.1} parent=1 // pred_region
      %s33 = ssub.s32 1152, 1152
      %34 = vsyncadd [#allocation6], %s33
      %s35 = sshll.u32 [#allocation5], 4
      %s36 = int_to_ptr.vmem [resolvable:$true] %s35
      %41 = dma.hbm_to_vmem [thread:$0]  %s3, 1152, %s36, [#allocation6], 64, 64, 4
    $region17: #{tpu_custom_call.1} parent=1 // pred_fallthru
      _
    // Predicated region
    $region18: #{tpu_custom_call.1} parent=1 // pred_check
      _
    $region19: #{tpu_custom_call.1} parent=1 // pred_check_branch
      %43 = sbr.rel (0) target = $region21
    $region20: #{tpu_custom_call.1} parent=1 // pred_region
      _
    $region21: #{tpu_custom_call.1} parent=1 // pred_fallthru
      _
    // Predicated region
    $region22: #{tpu_custom_call.1} parent=1 // pred_check
      _
    $region23: #{tpu_custom_call.1} parent=1 // pred_check_branch
      %45 = sbr.rel (0) target = $region25
    $region24: #{tpu_custom_call.1} parent=1 // pred_region
      _
    $region25: #{tpu_custom_call.1} parent=1 // pred_fallthru
      _
    // Predicated region
    $region26: #{tpu_custom_call.1} parent=1 // pred_check
      _
    $region27: #{tpu_custom_call.1} parent=1 // pred_check_branch
      %47 = sbr.rel (0) target = $region29
    $region28: #{tpu_custom_call.1} parent=1 // pred_region
      %48 = dma.done [#allocation3], 1024
    $region29: #{tpu_custom_call.1} parent=1 // pred_fallthru
      _
    // Predicated region
    $region30: #{tpu_custom_call.1} parent=1 // pred_check
      _
    $region31: #{tpu_custom_call.1} parent=1 // pred_check_branch
      %50 = sbr.rel (0) target = $region33
    $region32: #{tpu_custom_call.1} parent=1 // pred_region
      %51 = dma.done [#allocation6], 1152
    $region33: #{tpu_custom_call.1} parent=1 // pred_fallthru
      _
    %v53 = vld [vmem:[#allocation2] sm:$0xff]
    %v54 = vld [vmem:[#allocation2 + $0x8] sm:$0xff]
    %v55 = vld [vmem:[#allocation2 + $0x10] sm:$0xff]
    %v56 = vld [vmem:[#allocation2 + $0x18] sm:$0xff]
    %v57 = vld [vmem:[#allocation2 + $0x20] sm:$0xff]
    %v58 = vld [vmem:[#allocation2 + $0x28] sm:$0xff]
    %v59 = vld [vmem:[#allocation2 + $0x30] sm:$0xff]
    %v60 = vld [vmem:[#allocation2 + $0x38] sm:$0xff]
    %v61 = vld [vmem:[%s5] sm:$0xff]
    %v62 = vld [vmem:[%s5 + $0x8] sm:$0xff]
    %s63 = scalar_lea.vmem %s5, 16
    %v64 = vld [vmem:[%s63] sm:$0xff]
    %v65 = vld [vmem:[%s63 + $0x8] sm:$0xff]
    %s66 = scalar_lea.vmem %s5, 32
    %v67 = vld [vmem:[%s66] sm:$0xff]
    %v68 = vld [vmem:[%s66 + $0x8] sm:$0xff]
    %v69 = vld [vmem:[%s2] sm:$0xf]
    %v70 = vld [vmem:[%s2 + $0x4] sm:$0xf]
    %v71 = vpack.c.bf16 %v57, %v53
    %v72 = vpack.c.bf16 %v58, %v54
    %v73 = vpack.c.bf16 %v59, %v55
    %v74 = vpack.c.bf16 %v60, %v56
    %76 = vset.pattern.permute.xlu0 0
    %77 = vperm.xlu0 %76, %v61
    %v78 = vpop.permute.xlu0 %77
    %81 = vset.pattern.permute.xlu0 0
    %82 = vperm.xlu0 %81, %v62
    %v83 = vpop.permute.xlu0 %82
    %v87 = vunpack.c.l.b16 %v69
    %v88 = vunpack.c.l.b16 %v70
    %v89 = vpack.c.b16 %v88, %v87
    %vm90 = vcmask 130048
    %v92 = vsel %vm90, %v89, 0
    %94 = vmatprep.subr.bf16.mxu0 %v72
    %95 = vmatpush1.bf16.msra.mxu0 %v71
    %96 = vmatprep.subr.bf16.mxu0 0
    %97 = vmatpush1.bf16.msra.mxu0 0
    %98 = vmatprep.subr.bf16.mxu0 0
    %99 = vmatpush1.bf16.msra.mxu0 0
    %100 = vmatprep.subr.bf16.mxu0 0
    %101 = vmatpush1.bf16.msra.mxu0 0
    %102 = vmatprep.subr.bf16.mxu0 0
    %103 = vmatpush1.bf16.msra.mxu0 0
    %104 = vmatprep.subr.bf16.mxu0 0
    %105 = vmatpush1.bf16.msra.mxu0 0
    %106 = vmatprep.subr.bf16.mxu0 0
    %107 = vmatpush1.bf16.msra.mxu0 0
    %108 = vmatprep.subr.bf16.mxu0 0
    %109 = vmatpush1.bf16.msra.mxu0 0
    %110 = vmatprep.subr.bf16.mxu0 0
    %111 = vmatpush1.bf16.msra.mxu0 0
    %112 = vmatprep.subr.bf16.mxu0 0
    %113 = vmatpush1.bf16.msra.mxu0 0
    %114 = vmatprep.subr.bf16.mxu0 0
    %115 = vmatpush1.bf16.msra.mxu0 0
    %116 = vmatprep.subr.bf16.mxu0 0
    %117 = vmatpush1.bf16.msra.mxu0 0
    %118 = vmatprep.subr.bf16.mxu0 0
    %119 = vmatpush1.bf16.msra.mxu0 0
    %120 = vmatprep.subr.bf16.mxu0 0
    %121 = vmatpush1.bf16.msra.mxu0 0
    %122 = vmatprep.subr.bf16.mxu0 0
    %123 = vmatpush1.bf16.msra.mxu0 0
    %124 = vmatprep.subr.bf16.mxu0 0
    %125 = vmatpush1.bf16.msra.mxu0 0
    %126 = vmatprep.mubr.bf16.mxu0 0
    %127 = vmatmul.mubr.bf16.gmra.mrb[0].mxu0 %v92
    %v128 = vpop.f32.mrb[0].mxu0
    %v129 = vadd.f32 %v78, %v128
    %v130 = vpop.f32.mrb[0].mxu0
    %v131 = vadd.f32 %v78, %v130
    %v132 = vpop.f32.mrb[0].mxu0
    %v133 = vadd.f32 %v83, %v132
    %v134 = vpop.f32.mrb[0].mxu0
    %v135 = vadd.f32 %v83, %v134
    %136 = vdwg.mxu0
    %137 = vmatprep.subr.bf16.mxu0 %v74
    %138 = vmatpush1.bf16.msra.mxu0 %v73
    %139 = vmatprep.subr.bf16.mxu0 0
    %140 = vmatpush1.bf16.msra.mxu0 0
    %141 = vmatprep.subr.bf16.mxu0 0
    %142 = vmatpush1.bf16.msra.mxu0 0
    %143 = vmatprep.subr.bf16.mxu0 0
    %144 = vmatpush1.bf16.msra.mxu0 0
    %145 = vmatprep.subr.bf16.mxu0 0
    %146 = vmatpush1.bf16.msra.mxu0 0
    %147 = vmatprep.subr.bf16.mxu0 0
    %148 = vmatpush1.bf16.msra.mxu0 0
    %149 = vmatprep.subr.bf16.mxu0 0
    %150 = vmatpush1.bf16.msra.mxu0 0
    %151 = vmatprep.subr.bf16.mxu0 0
    %152 = vmatpush1.bf16.msra.mxu0 0
    %153 = vmatprep.subr.bf16.mxu0 0
    %154 = vmatpush1.bf16.msra.mxu0 0
    %155 = vmatprep.subr.bf16.mxu0 0
    %156 = vmatpush1.bf16.msra.mxu0 0
    %157 = vmatprep.subr.bf16.mxu0 0
    %158 = vmatpush1.bf16.msra.mxu0 0
    %159 = vmatprep.subr.bf16.mxu0 0
    %160 = vmatpush1.bf16.msra.mxu0 0
    %161 = vmatprep.subr.bf16.mxu0 0
    %162 = vmatpush1.bf16.msra.mxu0 0
    %163 = vmatprep.subr.bf16.mxu0 0
    %164 = vmatpush1.bf16.msra.mxu0 0
    %165 = vmatprep.subr.bf16.mxu0 0
    %166 = vmatpush1.bf16.msra.mxu0 0
    %167 = vmatprep.subr.bf16.mxu0 0
    %168 = vmatpush1.bf16.msra.mxu0 0
    %169 = vmatprep.mubr.bf16.mxu0 0
    %170 = vmatmul.mubr.bf16.gmra.mrb[0].mxu0 %v92
    %v171 = vpop.f32.mrb[0].mxu0
    %v172 = vadd.f32 %v78, %v171
    %v173 = vpop.f32.mrb[0].mxu0
    %v174 = vadd.f32 %v78, %v173
    %v175 = vpop.f32.mrb[0].mxu0
    %v176 = vadd.f32 %v83, %v175
    %v177 = vpop.f32.mrb[0].mxu0
    %v178 = vadd.f32 %v83, %v177
    %179 = vdwg.mxu0
    %v180 = vmax.f32 %v129, 0.0
    %v181 = vmax.f32 %v131, 0.0
    %v182 = vmax.f32 %v172, 0.0
    %v183 = vmax.f32 %v174, 0.0
    %v184 = vmax.f32 %v133, 0.0
    %v185 = vmax.f32 %v135, 0.0
    %v186 = vmax.f32 %v176, 0.0
    %v187 = vmax.f32 %v178, 0.0
    %188 = vrot.lane.b32.xlu0 %v180, 17
    %v189 = vpop.permute.xlu0 %188
    %190 = vrot.lane.b32.xlu0 %v184, 17
    %v191 = vpop.permute.xlu0 %190
    %192 = vrot.lane.b32.xlu0 %v181, 17
    %v193 = vpop.permute.xlu0 %192
    %194 = vrot.lane.b32.xlu0 %v185, 17
    %v195 = vpop.permute.xlu0 %194
    %196 = vrot.lane.b32.xlu0 %v182, 17
    %v197 = vpop.permute.xlu0 %196
    %198 = vrot.lane.b32.xlu0 %v186, 17
    %v199 = vpop.permute.xlu0 %198
    %200 = vrot.lane.b32.xlu0 %v183, 17
    %v201 = vpop.permute.xlu0 %200
    %202 = vrot.lane.b32.xlu0 %v187, 17
    %v203 = vpop.permute.xlu0 %202
    %v204 = vlaneseq
    %v205 = vand.u32 %v204, 127
    %vm206 = vcmp.lt.s32.totalorder %v205, 17
    %v207 = vsel %vm206, %v197, %v201
    %v208 = vsel %vm206, %v199, %v203
    %v209 = vsel %vm206, %v193, %v197
    %v210 = vsel %vm206, %v195, %v199
    %v211 = vsel %vm206, %v189, %v193
    %v212 = vsel %vm206, %v191, %v195
    %v213 = vsel %vm206, %v201, %v189
    %v214 = vsel %vm206, %v203, %v191
    %v215 = vld [vmem:[%s1] sm:$0xf]
    %v217 = vlaneseq
    %v218 = vshrl.u32 %v217, 7
    %v219 = vsub.s32 0, %v218
    %v220 = vrot.slane %v215, %v219
    %v221 = vlaneseq
    %v222 = vshrl.u32 %v221, 7
    %v223 = vsub.s32 1, %v222
    %v224 = vrot.slane %v215, %v223
    %v225 = vlaneseq
    %v226 = vshrl.u32 %v225, 7
    %v227 = vsub.s32 2, %v226
    %v228 = vrot.slane %v215, %v227
    %v229 = vlaneseq
    %v230 = vshrl.u32 %v229, 7
    %v231 = vsub.s32 3, %v230
    %v232 = vrot.slane %v215, %v231
    %v237 = vmul.f32 %v213, %v220
    %v238 = vmul.f32 %v211, %v224
    %v239 = vmul.f32 %v209, %v228
    %v240 = vmul.f32 %v207, %v232
    %v241 = vmul.f32 %v214, %v220
    %v242 = vmul.f32 %v212, %v224
    %v243 = vmul.f32 %v210, %v228
    %v244 = vmul.f32 %v208, %v232
    %v245 = vld [vmem:[#allocation5] sm:$0xf]
    %v246 = vld [vmem:[#allocation5 + $0x4] sm:$0xf]
    %v247 = vpack.c.bf16 %v241, %v237
    %v248 = vpack.c.bf16 %v242, %v238
    %v249 = vpack.c.bf16 %v243, %v239
    %v250 = vpack.c.bf16 %v244, %v240
    %251 = vrot.lane.b32.xlu0 %v180, 16
    %v252 = vpop.permute.xlu0 %251
    %253 = vrot.lane.b32.xlu0 %v184, 16
    %v254 = vpop.permute.xlu0 %253
    %255 = vrot.lane.b32.xlu0 %v181, 16
    %v256 = vpop.permute.xlu0 %255
    %257 = vrot.lane.b32.xlu0 %v185, 16
    %v258 = vpop.permute.xlu0 %257
    %259 = vrot.lane.b32.xlu0 %v182, 16
    %v260 = vpop.permute.xlu0 %259
    %261 = vrot.lane.b32.xlu0 %v186, 16
    %v262 = vpop.permute.xlu0 %261
    %263 = vrot.lane.b32.xlu0 %v183, 16
    %v264 = vpop.permute.xlu0 %263
    %265 = vrot.lane.b32.xlu0 %v187, 16
    %v266 = vpop.permute.xlu0 %265
    %vm267 = vcmp.lt.s32.totalorder %v205, 16
    %v268 = vsel %vm267, %v260, %v264
    %v269 = vsel %vm267, %v262, %v266
    %v270 = vsel %vm267, %v256, %v260
    %v271 = vsel %vm267, %v258, %v262
    %v272 = vsel %vm267, %v252, %v256
    %v273 = vsel %vm267, %v254, %v258
    %v274 = vsel %vm267, %v264, %v252
    %v275 = vsel %vm267, %v266, %v254
    %s276 = scalar_lea.vmem %s1, 4
    %v277 = vld [vmem:[%s276] sm:$0xf]
    %v279 = vlaneseq
    %v280 = vshrl.u32 %v279, 7
    %v281 = vsub.s32 0, %v280
    %v282 = vrot.slane %v277, %v281
    %v283 = vlaneseq
    %v284 = vshrl.u32 %v283, 7
    %v285 = vsub.s32 1, %v284
    %v286 = vrot.slane %v277, %v285
    %v287 = vlaneseq
    %v288 = vshrl.u32 %v287, 7
    %v289 = vsub.s32 2, %v288
    %v290 = vrot.slane %v277, %v289
    %v291 = vlaneseq
    %v292 = vshrl.u32 %v291, 7
    %v293 = vsub.s32 3, %v292
    %v294 = vrot.slane %v277, %v293
    %v299 = vmul.f32 %v274, %v282
    %v300 = vmul.f32 %v272, %v286
    %v301 = vmul.f32 %v270, %v290
    %v302 = vmul.f32 %v268, %v294
    %v303 = vmul.f32 %v275, %v282
    %v304 = vmul.f32 %v273, %v286
    %v305 = vmul.f32 %v271, %v290
    %v306 = vmul.f32 %v269, %v294
    %s307 = scalar_lea.vmem [#allocation5], 8
    %v308 = vld [vmem:[%s307] sm:$0xf]
    %v309 = vld [vmem:[%s307 + $0x4] sm:$0xf]
    %v310 = vpack.c.bf16 %v303, %v299
    %v311 = vpack.c.bf16 %v304, %v300
    %v312 = vpack.c.bf16 %v305, %v301
    %v313 = vpack.c.bf16 %v306, %v302
    %v316 = vunpack.c.l.b16 %v308
    %v317 = vunpack.c.l.b16 %v309
    %v318 = vpack.c.b16 %v317, %v316
    %v320 = vsel %vm90, %v318, 0
    %322 = vmatprep.subr.bf16.mxu0 %v311
    %323 = vmatpush1.bf16.msra.mxu0 %v310
    %324 = vmatprep.subr.bf16.mxu0 0
    %325 = vmatpush1.bf16.msra.mxu0 0
    %326 = vmatprep.subr.bf16.mxu0 0
    %327 = vmatpush1.bf16.msra.mxu0 0
    %328 = vmatprep.subr.bf16.mxu0 0
    %329 = vmatpush1.bf16.msra.mxu0 0
    %330 = vmatprep.subr.bf16.mxu0 0
    %331 = vmatpush1.bf16.msra.mxu0 0
    %332 = vmatprep.subr.bf16.mxu0 0
    %333 = vmatpush1.bf16.msra.mxu0 0
    %334 = vmatprep.subr.bf16.mxu0 0
    %335 = vmatpush1.bf16.msra.mxu0 0
    %336 = vmatprep.subr.bf16.mxu0 0
    %337 = vmatpush1.bf16.msra.mxu0 0
    %338 = vmatprep.subr.bf16.mxu0 0
    %339 = vmatpush1.bf16.msra.mxu0 0
    %340 = vmatprep.subr.bf16.mxu0 0
    %341 = vmatpush1.bf16.msra.mxu0 0
    %342 = vmatprep.subr.bf16.mxu0 0
    %343 = vmatpush1.bf16.msra.mxu0 0
    %344 = vmatprep.subr.bf16.mxu0 0
    %345 = vmatpush1.bf16.msra.mxu0 0
    %346 = vmatprep.subr.bf16.mxu0 0
    %347 = vmatpush1.bf16.msra.mxu0 0
    %348 = vmatprep.subr.bf16.mxu0 0
    %349 = vmatpush1.bf16.msra.mxu0 0
    %350 = vmatprep.subr.bf16.mxu0 0
    %351 = vmatpush1.bf16.msra.mxu0 0
    %352 = vmatprep.subr.bf16.mxu0 0
    %353 = vmatpush1.bf16.msra.mxu0 0
    %354 = vmatprep.mubr.bf16.mxu0 0
    %355 = vmatmul.mubr.bf16.gmra.mrb[0].mxu0 %v320
    %v356 = vpop.f32.mrb[0].mxu0
    %v357 = vadd.f32 0.0, %v356
    %v358 = vpop.f32.mrb[0].mxu0
    %v359 = vadd.f32 0.0, %v358
    %v360 = vpop.f32.mrb[0].mxu0
    %v361 = vadd.f32 0.0, %v360
    %v362 = vpop.f32.mrb[0].mxu0
    %v363 = vadd.f32 0.0, %v362
    %364 = vdwg.mxu0
    %365 = vmatprep.subr.bf16.mxu0 %v313
    %366 = vmatpush1.bf16.msra.mxu0 %v312
    %367 = vmatprep.subr.bf16.mxu0 0
    %368 = vmatpush1.bf16.msra.mxu0 0
    %369 = vmatprep.subr.bf16.mxu0 0
    %370 = vmatpush1.bf16.msra.mxu0 0
    %371 = vmatprep.subr.bf16.mxu0 0
    %372 = vmatpush1.bf16.msra.mxu0 0
    %373 = vmatprep.subr.bf16.mxu0 0
    %374 = vmatpush1.bf16.msra.mxu0 0
    %375 = vmatprep.subr.bf16.mxu0 0
    %376 = vmatpush1.bf16.msra.mxu0 0
    %377 = vmatprep.subr.bf16.mxu0 0
    %378 = vmatpush1.bf16.msra.mxu0 0
    %379 = vmatprep.subr.bf16.mxu0 0
    %380 = vmatpush1.bf16.msra.mxu0 0
    %381 = vmatprep.subr.bf16.mxu0 0
    %382 = vmatpush1.bf16.msra.mxu0 0
    %383 = vmatprep.subr.bf16.mxu0 0
    %384 = vmatpush1.bf16.msra.mxu0 0
    %385 = vmatprep.subr.bf16.mxu0 0
    %386 = vmatpush1.bf16.msra.mxu0 0
    %387 = vmatprep.subr.bf16.mxu0 0
    %388 = vmatpush1.bf16.msra.mxu0 0
    %389 = vmatprep.subr.bf16.mxu0 0
    %390 = vmatpush1.bf16.msra.mxu0 0
    %391 = vmatprep.subr.bf16.mxu0 0
    %392 = vmatpush1.bf16.msra.mxu0 0
    %393 = vmatprep.subr.bf16.mxu0 0
    %394 = vmatpush1.bf16.msra.mxu0 0
    %395 = vmatprep.subr.bf16.mxu0 0
    %396 = vmatpush1.bf16.msra.mxu0 0
    %397 = vmatprep.mubr.bf16.mxu0 0
    %398 = vmatmul.mubr.bf16.gmra.mrb[0].mxu0 %v320
    %v399 = vpop.f32.mrb[0].mxu0
    %v400 = vadd.f32 0.0, %v399
    %v401 = vpop.f32.mrb[0].mxu0
    %v402 = vadd.f32 0.0, %v401
    %v403 = vpop.f32.mrb[0].mxu0
    %v404 = vadd.f32 0.0, %v403
    %v405 = vpop.f32.mrb[0].mxu0
    %v406 = vadd.f32 0.0, %v405
    %407 = vdwg.mxu0
    %v410 = vunpack.c.l.b16 %v245
    %v411 = vunpack.c.l.b16 %v246
    %v412 = vpack.c.b16 %v411, %v410
    %v414 = vsel %vm90, %v412, 0
    %416 = vmatprep.subr.bf16.mxu0 %v248
    %417 = vmatpush1.bf16.msra.mxu0 %v247
    %418 = vmatprep.subr.bf16.mxu0 0
    %419 = vmatpush1.bf16.msra.mxu0 0
    %420 = vmatprep.subr.bf16.mxu0 0
    %421 = vmatpush1.bf16.msra.mxu0 0
    %422 = vmatprep.subr.bf16.mxu0 0
    %423 = vmatpush1.bf16.msra.mxu0 0
    %424 = vmatprep.subr.bf16.mxu0 0
    %425 = vmatpush1.bf16.msra.mxu0 0
    %426 = vmatprep.subr.bf16.mxu0 0
    %427 = vmatpush1.bf16.msra.mxu0 0
    %428 = vmatprep.subr.bf16.mxu0 0
    %429 = vmatpush1.bf16.msra.mxu0 0
    %430 = vmatprep.subr.bf16.mxu0 0
    %431 = vmatpush1.bf16.msra.mxu0 0
    %432 = vmatprep.subr.bf16.mxu0 0
    %433 = vmatpush1.bf16.msra.mxu0 0
    %434 = vmatprep.subr.bf16.mxu0 0
    %435 = vmatpush1.bf16.msra.mxu0 0
    %436 = vmatprep.subr.bf16.mxu0 0
    %437 = vmatpush1.bf16.msra.mxu0 0
    %438 = vmatprep.subr.bf16.mxu0 0
    %439 = vmatpush1.bf16.msra.mxu0 0
    %440 = vmatprep.subr.bf16.mxu0 0
    %441 = vmatpush1.bf16.msra.mxu0 0
    %442 = vmatprep.subr.bf16.mxu0 0
    %443 = vmatpush1.bf16.msra.mxu0 0
    %444 = vmatprep.subr.bf16.mxu0 0
    %445 = vmatpush1.bf16.msra.mxu0 0
    %446 = vmatprep.subr.bf16.mxu0 0
    %447 = vmatpush1.bf16.msra.mxu0 0
    %448 = vmatprep.mubr.bf16.mxu0 0
    %449 = vmatmul.mubr.bf16.gmra.mrb[0].mxu0 %v414
    %v450 = vpop.f32.mrb[0].mxu0
    %v451 = vadd.f32 %v357, %v450
    %v452 = vpop.f32.mrb[0].mxu0
    %v453 = vadd.f32 %v359, %v452
    %v454 = vpop.f32.mrb[0].mxu0
    %v455 = vadd.f32 %v361, %v454
    %v456 = vpop.f32.mrb[0].mxu0
    %v457 = vadd.f32 %v363, %v456
    %458 = vdwg.mxu0
    %459 = vmatprep.subr.bf16.mxu0 %v250
    %460 = vmatpush1.bf16.msra.mxu0 %v249
    %461 = vmatprep.subr.bf16.mxu0 0
    %462 = vmatpush1.bf16.msra.mxu0 0
    %463 = vmatprep.subr.bf16.mxu0 0
    %464 = vmatpush1.bf16.msra.mxu0 0
    %465 = vmatprep.subr.bf16.mxu0 0
    %466 = vmatpush1.bf16.msra.mxu0 0
    %467 = vmatprep.subr.bf16.mxu0 0
    %468 = vmatpush1.bf16.msra.mxu0 0
    %469 = vmatprep.subr.bf16.mxu0 0
    %470 = vmatpush1.bf16.msra.mxu0 0
    %471 = vmatprep.subr.bf16.mxu0 0
    %472 = vmatpush1.bf16.msra.mxu0 0
    %473 = vmatprep.subr.bf16.mxu0 0
    %474 = vmatpush1.bf16.msra.mxu0 0
    %475 = vmatprep.subr.bf16.mxu0 0
    %476 = vmatpush1.bf16.msra.mxu0 0
    %477 = vmatprep.subr.bf16.mxu0 0
    %478 = vmatpush1.bf16.msra.mxu0 0
    %479 = vmatprep.subr.bf16.mxu0 0
    %480 = vmatpush1.bf16.msra.mxu0 0
    %481 = vmatprep.subr.bf16.mxu0 0
    %482 = vmatpush1.bf16.msra.mxu0 0
    %483 = vmatprep.subr.bf16.mxu0 0
    %484 = vmatpush1.bf16.msra.mxu0 0
    %485 = vmatprep.subr.bf16.mxu0 0
    %486 = vmatpush1.bf16.msra.mxu0 0
    %487 = vmatprep.subr.bf16.mxu0 0
    %488 = vmatpush1.bf16.msra.mxu0 0
    %489 = vmatprep.subr.bf16.mxu0 0
    %490 = vmatpush1.bf16.msra.mxu0 0
    %491 = vmatprep.mubr.bf16.mxu0 0
    %492 = vmatmul.mubr.bf16.gmra.mrb[0].mxu0 %v414
    %v493 = vpop.f32.mrb[0].mxu0
    %v494 = vadd.f32 %v400, %v493
    %v495 = vpop.f32.mrb[0].mxu0
    %v496 = vadd.f32 %v402, %v495
    %v497 = vpop.f32.mrb[0].mxu0
    %v498 = vadd.f32 %v404, %v497
    %v499 = vpop.f32.mrb[0].mxu0
    %v500 = vadd.f32 %v406, %v499
    %501 = vdwg.mxu0
    %502 = vrot.lane.b32.xlu0 %v180, 15
    %v503 = vpop.permute.xlu0 %502
    %504 = vrot.lane.b32.xlu0 %v184, 15
    %v505 = vpop.permute.xlu0 %504
    %506 = vrot.lane.b32.xlu0 %v181, 15
    %v507 = vpop.permute.xlu0 %506
    %508 = vrot.lane.b32.xlu0 %v185, 15
    %v509 = vpop.permute.xlu0 %508
    %510 = vrot.lane.b32.xlu0 %v182, 15
    %v511 = vpop.permute.xlu0 %510
    %512 = vrot.lane.b32.xlu0 %v186, 15
    %v513 = vpop.permute.xlu0 %512
    %514 = vrot.lane.b32.xlu0 %v183, 15
    %v515 = vpop.permute.xlu0 %514
    %516 = vrot.lane.b32.xlu0 %v187, 15
    %v517 = vpop.permute.xlu0 %516
    %vm518 = vcmp.lt.s32.totalorder %v205, 15
    %v519 = vsel %vm518, %v511, %v515
    %v520 = vsel %vm518, %v513, %v517
    %v521 = vsel %vm518, %v507, %v511
    %v522 = vsel %vm518, %v509, %v513
    %v523 = vsel %vm518, %v503, %v507
    %v524 = vsel %vm518, %v505, %v509
    %v525 = vsel %vm518, %v515, %v503
    %v526 = vsel %vm518, %v517, %v505
    %s527 = scalar_lea.vmem %s1, 8
    %v528 = vld [vmem:[%s527] sm:$0xf]
    %v530 = vlaneseq
    %v531 = vshrl.u32 %v530, 7
    %v532 = vsub.s32 0, %v531
    %v533 = vrot.slane %v528, %v532
    %v534 = vlaneseq
    %v535 = vshrl.u32 %v534, 7
    %v536 = vsub.s32 1, %v535
    %v537 = vrot.slane %v528, %v536
    %v538 = vlaneseq
    %v539 = vshrl.u32 %v538, 7
    %v540 = vsub.s32 2, %v539
    %v541 = vrot.slane %v528, %v540
    %v542 = vlaneseq
    %v543 = vshrl.u32 %v542, 7
    %v544 = vsub.s32 3, %v543
    %v545 = vrot.slane %v528, %v544
    %v550 = vmul.f32 %v525, %v533
    %v551 = vmul.f32 %v523, %v537
    %v552 = vmul.f32 %v521, %v541
    %v553 = vmul.f32 %v519, %v545
    %v554 = vmul.f32 %v526, %v533
    %v555 = vmul.f32 %v524, %v537
    %v556 = vmul.f32 %v522, %v541
    %v557 = vmul.f32 %v520, %v545
    %s558 = scalar_lea.vmem [#allocation5], 16
    %v559 = vld [vmem:[%s558] sm:$0xf]
    %v560 = vld [vmem:[%s558 + $0x4] sm:$0xf]
    %v561 = vpack.c.bf16 %v554, %v550
    %v562 = vpack.c.bf16 %v555, %v551
    %v563 = vpack.c.bf16 %v556, %v552
    %v564 = vpack.c.bf16 %v557, %v553
    %v567 = vunpack.c.l.b16 %v559
    %v568 = vunpack.c.l.b16 %v560
    %v569 = vpack.c.b16 %v568, %v567
    %v571 = vsel %vm90, %v569, 0
    %573 = vmatprep.subr.bf16.mxu0 %v562
    %574 = vmatpush1.bf16.msra.mxu0 %v561
    %575 = vmatprep.subr.bf16.mxu0 0
    %576 = vmatpush1.bf16.msra.mxu0 0
    %577 = vmatprep.subr.bf16.mxu0 0
    %578 = vmatpush1.bf16.msra.mxu0 0
    %579 = vmatprep.subr.bf16.mxu0 0
    %580 = vmatpush1.bf16.msra.mxu0 0
    %581 = vmatprep.subr.bf16.mxu0 0
    %582 = vmatpush1.bf16.msra.mxu0 0
    %583 = vmatprep.subr.bf16.mxu0 0
    %584 = vmatpush1.bf16.msra.mxu0 0
    %585 = vmatprep.subr.bf16.mxu0 0
    %586 = vmatpush1.bf16.msra.mxu0 0
    %587 = vmatprep.subr.bf16.mxu0 0
    %588 = vmatpush1.bf16.msra.mxu0 0
    %589 = vmatprep.subr.bf16.mxu0 0
    %590 = vmatpush1.bf16.msra.mxu0 0
    %591 = vmatprep.subr.bf16.mxu0 0
    %592 = vmatpush1.bf16.msra.mxu0 0
    %593 = vmatprep.subr.bf16.mxu0 0
    %594 = vmatpush1.bf16.msra.mxu0 0
    %595 = vmatprep.subr.bf16.mxu0 0
    %596 = vmatpush1.bf16.msra.mxu0 0
    %597 = vmatprep.subr.bf16.mxu0 0
    %598 = vmatpush1.bf16.msra.mxu0 0
    %599 = vmatprep.subr.bf16.mxu0 0
    %600 = vmatpush1.bf16.msra.mxu0 0
    %601 = vmatprep.subr.bf16.mxu0 0
    %602 = vmatpush1.bf16.msra.mxu0 0
    %603 = vmatprep.subr.bf16.mxu0 0
    %604 = vmatpush1.bf16.msra.mxu0 0
    %605 = vmatprep.mubr.bf16.mxu0 0
    %606 = vmatmul.mubr.bf16.gmra.mrb[0].mxu0 %v571
    %v607 = vpop.f32.mrb[0].mxu0
    %v608 = vadd.f32 0.0, %v607
    %v609 = vpop.f32.mrb[0].mxu0
    %v610 = vadd.f32 0.0, %v609
    %v611 = vpop.f32.mrb[0].mxu0
    %v612 = vadd.f32 0.0, %v611
    %v613 = vpop.f32.mrb[0].mxu0
    %v614 = vadd.f32 0.0, %v613
    %615 = vdwg.mxu0
    %616 = vmatprep.subr.bf16.mxu0 %v564
    %617 = vmatpush1.bf16.msra.mxu0 %v563
    %618 = vmatprep.subr.bf16.mxu0 0
    %619 = vmatpush1.bf16.msra.mxu0 0
    %620 = vmatprep.subr.bf16.mxu0 0
    %621 = vmatpush1.bf16.msra.mxu0 0
    %622 = vmatprep.subr.bf16.mxu0 0
    %623 = vmatpush1.bf16.msra.mxu0 0
    %624 = vmatprep.subr.bf16.mxu0 0
    %625 = vmatpush1.bf16.msra.mxu0 0
    %626 = vmatprep.subr.bf16.mxu0 0
    %627 = vmatpush1.bf16.msra.mxu0 0
    %628 = vmatprep.subr.bf16.mxu0 0
    %629 = vmatpush1.bf16.msra.mxu0 0
    %630 = vmatprep.subr.bf16.mxu0 0
    %631 = vmatpush1.bf16.msra.mxu0 0
    %632 = vmatprep.subr.bf16.mxu0 0
    %633 = vmatpush1.bf16.msra.mxu0 0
    %634 = vmatprep.subr.bf16.mxu0 0
    %635 = vmatpush1.bf16.msra.mxu0 0
    %636 = vmatprep.subr.bf16.mxu0 0
    %637 = vmatpush1.bf16.msra.mxu0 0
    %638 = vmatprep.subr.bf16.mxu0 0
    %639 = vmatpush1.bf16.msra.mxu0 0
    %640 = vmatprep.subr.bf16.mxu0 0
    %641 = vmatpush1.bf16.msra.mxu0 0
    %642 = vmatprep.subr.bf16.mxu0 0
    %643 = vmatpush1.bf16.msra.mxu0 0
    %644 = vmatprep.subr.bf16.mxu0 0
    %645 = vmatpush1.bf16.msra.mxu0 0
    %646 = vmatprep.subr.bf16.mxu0 0
    %647 = vmatpush1.bf16.msra.mxu0 0
    %648 = vmatprep.mubr.bf16.mxu0 0
    %649 = vmatmul.mubr.bf16.gmra.mrb[0].mxu0 %v571
    %v650 = vpop.f32.mrb[0].mxu0
    %v651 = vadd.f32 0.0, %v650
    %v652 = vpop.f32.mrb[0].mxu0
    %v653 = vadd.f32 0.0, %v652
    %v654 = vpop.f32.mrb[0].mxu0
    %v655 = vadd.f32 0.0, %v654
    %v656 = vpop.f32.mrb[0].mxu0
    %v657 = vadd.f32 0.0, %v656
    %658 = vdwg.mxu0
    %v659 = vadd.f32 %v451, %v608
    %v660 = vadd.f32 %v453, %v610
    %v661 = vadd.f32 %v494, %v651
    %v662 = vadd.f32 %v496, %v653
    %v663 = vadd.f32 %v455, %v612
    %v664 = vadd.f32 %v457, %v614
    %v665 = vadd.f32 %v498, %v655
    %v666 = vadd.f32 %v500, %v657
    %667 = vrot.lane.b32.xlu0 %v180, 1
    %v668 = vpop.permute.xlu0 %667
    %669 = vrot.lane.b32.xlu0 %v184, 1
    %v670 = vpop.permute.xlu0 %669
    %671 = vrot.lane.b32.xlu0 %v181, 1
    %v672 = vpop.permute.xlu0 %671
    %673 = vrot.lane.b32.xlu0 %v185, 1
    %v674 = vpop.permute.xlu0 %673
    %675 = vrot.lane.b32.xlu0 %v182, 1
    %v676 = vpop.permute.xlu0 %675
    %677 = vrot.lane.b32.xlu0 %v186, 1
    %v678 = vpop.permute.xlu0 %677
    %679 = vrot.lane.b32.xlu0 %v183, 1
    %v680 = vpop.permute.xlu0 %679
    %681 = vrot.lane.b32.xlu0 %v187, 1
    %v682 = vpop.permute.xlu0 %681
    %vm683 = vcmp.lt.s32.totalorder %v205, 1
    %v684 = vsel %vm683, %v676, %v680
    %v685 = vsel %vm683, %v678, %v682
    %v686 = vsel %vm683, %v672, %v676
    %v687 = vsel %vm683, %v674, %v678
    %v688 = vsel %vm683, %v668, %v672
    %v689 = vsel %vm683, %v670, %v674
    %v690 = vsel %vm683, %v680, %v668
    %v691 = vsel %vm683, %v682, %v670
    %s692 = scalar_lea.vmem %s1, 12
    %v693 = vld [vmem:[%s692] sm:$0xf]
    %v695 = vlaneseq
    %v696 = vshrl.u32 %v695, 7
    %v697 = vsub.s32 0, %v696
    %v698 = vrot.slane %v693, %v697
    %v699 = vlaneseq
    %v700 = vshrl.u32 %v699, 7
    %v701 = vsub.s32 1, %v700
    %v702 = vrot.slane %v693, %v701
    %v703 = vlaneseq
    %v704 = vshrl.u32 %v703, 7
    %v705 = vsub.s32 2, %v704
    %v706 = vrot.slane %v693, %v705
    %v707 = vlaneseq
    %v708 = vshrl.u32 %v707, 7
    %v709 = vsub.s32 3, %v708
    %v710 = vrot.slane %v693, %v709
    %v715 = vmul.f32 %v690, %v698
    %v716 = vmul.f32 %v688, %v702
    %v717 = vmul.f32 %v686, %v706
    %v718 = vmul.f32 %v684, %v710
    %v719 = vmul.f32 %v691, %v698
    %v720 = vmul.f32 %v689, %v702
    %v721 = vmul.f32 %v687, %v706
    %v722 = vmul.f32 %v685, %v710
    %s723 = scalar_lea.vmem [#allocation5], 24
    %v724 = vld [vmem:[%s723] sm:$0xf]
    %v725 = vld [vmem:[%s723 + $0x4] sm:$0xf]
    %v726 = vpack.c.bf16 %v719, %v715
    %v727 = vpack.c.bf16 %v720, %v716
    %v728 = vpack.c.bf16 %v721, %v717
    %v729 = vpack.c.bf16 %v722, %v718
    %v732 = vunpack.c.l.b16 %v724
    %v733 = vunpack.c.l.b16 %v725
    %v734 = vpack.c.b16 %v733, %v732
    %v736 = vsel %vm90, %v734, 0
    %738 = vmatprep.subr.bf16.mxu0 %v727
    %739 = vmatpush1.bf16.msra.mxu0 %v726
    %740 = vmatprep.subr.bf16.mxu0 0
    %741 = vmatpush1.bf16.msra.mxu0 0
    %742 = vmatprep.subr.bf16.mxu0 0
    %743 = vmatpush1.bf16.msra.mxu0 0
    %744 = vmatprep.subr.bf16.mxu0 0
    %745 = vmatpush1.bf16.msra.mxu0 0
    %746 = vmatprep.subr.bf16.mxu0 0
    %747 = vmatpush1.bf16.msra.mxu0 0
    %748 = vmatprep.subr.bf16.mxu0 0
    %749 = vmatpush1.bf16.msra.mxu0 0
    %750 = vmatprep.subr.bf16.mxu0 0
    %751 = vmatpush1.bf16.msra.mxu0 0
    %752 = vmatprep.subr.bf16.mxu0 0
    %753 = vmatpush1.bf16.msra.mxu0 0
    %754 = vmatprep.subr.bf16.mxu0 0
    %755 = vmatpush1.bf16.msra.mxu0 0
    %756 = vmatprep.subr.bf16.mxu0 0
    %757 = vmatpush1.bf16.msra.mxu0 0
    %758 = vmatprep.subr.bf16.mxu0 0
    %759 = vmatpush1.bf16.msra.mxu0 0
    %760 = vmatprep.subr.bf16.mxu0 0
    %761 = vmatpush1.bf16.msra.mxu0 0
    %762 = vmatprep.subr.bf16.mxu0 0
    %763 = vmatpush1.bf16.msra.mxu0 0
    %764 = vmatprep.subr.bf16.mxu0 0
    %765 = vmatpush1.bf16.msra.mxu0 0
    %766 = vmatprep.subr.bf16.mxu0 0
    %767 = vmatpush1.bf16.msra.mxu0 0
    %768 = vmatprep.subr.bf16.mxu0 0
    %769 = vmatpush1.bf16.msra.mxu0 0
    %770 = vmatprep.mubr.bf16.mxu0 0
    %771 = vmatmul.mubr.bf16.gmra.mrb[0].mxu0 %v736
    %v772 = vpop.f32.mrb[0].mxu0
    %v773 = vadd.f32 0.0, %v772
    %v774 = vpop.f32.mrb[0].mxu0
    %v775 = vadd.f32 0.0, %v774
    %v776 = vpop.f32.mrb[0].mxu0
    %v777 = vadd.f32 0.0, %v776
    %v778 = vpop.f32.mrb[0].mxu0
    %v779 = vadd.f32 0.0, %v778
    %780 = vdwg.mxu0
    %781 = vmatprep.subr.bf16.mxu0 %v729
    %782 = vmatpush1.bf16.msra.mxu0 %v728
    %783 = vmatprep.subr.bf16.mxu0 0
    %784 = vmatpush1.bf16.msra.mxu0 0
    %785 = vmatprep.subr.bf16.mxu0 0
    %786 = vmatpush1.bf16.msra.mxu0 0
    %787 = vmatprep.subr.bf16.mxu0 0
    %788 = vmatpush1.bf16.msra.mxu0 0
    %789 = vmatprep.subr.bf16.mxu0 0
    %790 = vmatpush1.bf16.msra.mxu0 0
    %791 = vmatprep.subr.bf16.mxu0 0
    %792 = vmatpush1.bf16.msra.mxu0 0
    %793 = vmatprep.subr.bf16.mxu0 0
    %794 = vmatpush1.bf16.msra.mxu0 0
    %795 = vmatprep.subr.bf16.mxu0 0
    %796 = vmatpush1.bf16.msra.mxu0 0
    %797 = vmatprep.subr.bf16.mxu0 0
    %798 = vmatpush1.bf16.msra.mxu0 0
    %799 = vmatprep.subr.bf16.mxu0 0
    %800 = vmatpush1.bf16.msra.mxu0 0
    %801 = vmatprep.subr.bf16.mxu0 0
    %802 = vmatpush1.bf16.msra.mxu0 0
    %803 = vmatprep.subr.bf16.mxu0 0
    %804 = vmatpush1.bf16.msra.mxu0 0
    %805 = vmatprep.subr.bf16.mxu0 0
    %806 = vmatpush1.bf16.msra.mxu0 0
    %807 = vmatprep.subr.bf16.mxu0 0
    %808 = vmatpush1.bf16.msra.mxu0 0
    %809 = vmatprep.subr.bf16.mxu0 0
    %810 = vmatpush1.bf16.msra.mxu0 0
    %811 = vmatprep.subr.bf16.mxu0 0
    %812 = vmatpush1.bf16.msra.mxu0 0
    %813 = vmatprep.mubr.bf16.mxu0 0
    %814 = vmatmul.mubr.bf16.gmra.mrb[0].mxu0 %v736
    %v815 = vpop.f32.mrb[0].mxu0
    %v816 = vadd.f32 0.0, %v815
    %v817 = vpop.f32.mrb[0].mxu0
    %v818 = vadd.f32 0.0, %v817
    %v819 = vpop.f32.mrb[0].mxu0
    %v820 = vadd.f32 0.0, %v819
    %v821 = vpop.f32.mrb[0].mxu0
    %v822 = vadd.f32 0.0, %v821
    %823 = vdwg.mxu0
    %v824 = vadd.f32 %v659, %v773
    %v825 = vadd.f32 %v660, %v775
    %v826 = vadd.f32 %v661, %v816
    %v827 = vadd.f32 %v662, %v818
    %v828 = vadd.f32 %v663, %v777
    %v829 = vadd.f32 %v664, %v779
    %v830 = vadd.f32 %v665, %v820
    %v831 = vadd.f32 %v666, %v822
    %s832 = scalar_lea.vmem [#allocation5], 32
    %v833 = vld [vmem:[%s832] sm:$0xf]
    %v834 = vld [vmem:[%s832 + $0x4] sm:$0xf]
    %v835 = vpack.c.bf16 %v184, %v180
    %v836 = vpack.c.bf16 %v185, %v181
    %v837 = vpack.c.bf16 %v186, %v182
    %v838 = vpack.c.bf16 %v187, %v183
    %v841 = vunpack.c.l.b16 %v833
    %v842 = vunpack.c.l.b16 %v834
    %v843 = vpack.c.b16 %v842, %v841
    %v845 = vsel %vm90, %v843, 0
    %847 = vmatprep.subr.bf16.mxu0 %v836
    %848 = vmatpush1.bf16.msra.mxu0 %v835
    %849 = vmatprep.subr.bf16.mxu0 0
    %850 = vmatpush1.bf16.msra.mxu0 0
    %851 = vmatprep.subr.bf16.mxu0 0
    %852 = vmatpush1.bf16.msra.mxu0 0
    %853 = vmatprep.subr.bf16.mxu0 0
    %854 = vmatpush1.bf16.msra.mxu0 0
    %855 = vmatprep.subr.bf16.mxu0 0
    %856 = vmatpush1.bf16.msra.mxu0 0
    %857 = vmatprep.subr.bf16.mxu0 0
    %858 = vmatpush1.bf16.msra.mxu0 0
    %859 = vmatprep.subr.bf16.mxu0 0
    %860 = vmatpush1.bf16.msra.mxu0 0
    %861 = vmatprep.subr.bf16.mxu0 0
    %862 = vmatpush1.bf16.msra.mxu0 0
    %863 = vmatprep.subr.bf16.mxu0 0
    %864 = vmatpush1.bf16.msra.mxu0 0
    %865 = vmatprep.subr.bf16.mxu0 0
    %866 = vmatpush1.bf16.msra.mxu0 0
    %867 = vmatprep.subr.bf16.mxu0 0
    %868 = vmatpush1.bf16.msra.mxu0 0
    %869 = vmatprep.subr.bf16.mxu0 0
    %870 = vmatpush1.bf16.msra.mxu0 0
    %871 = vmatprep.subr.bf16.mxu0 0
    %872 = vmatpush1.bf16.msra.mxu0 0
    %873 = vmatprep.subr.bf16.mxu0 0
    %874 = vmatpush1.bf16.msra.mxu0 0
    %875 = vmatprep.subr.bf16.mxu0 0
    %876 = vmatpush1.bf16.msra.mxu0 0
    %877 = vmatprep.subr.bf16.mxu0 0
    %878 = vmatpush1.bf16.msra.mxu0 0
    %879 = vmatprep.mubr.bf16.mxu0 0
    %880 = vmatmul.mubr.bf16.gmra.mrb[0].mxu0 %v845
    %v881 = vpop.f32.mrb[0].mxu0
    %v882 = vadd.f32 0.0, %v881
    %v883 = vpop.f32.mrb[0].mxu0
    %v884 = vadd.f32 0.0, %v883
    %v885 = vpop.f32.mrb[0].mxu0
    %v886 = vadd.f32 0.0, %v885
    %v887 = vpop.f32.mrb[0].mxu0
    %v888 = vadd.f32 0.0, %v887
    %889 = vdwg.mxu0
    %890 = vmatprep.subr.bf16.mxu0 %v838
    %891 = vmatpush1.bf16.msra.mxu0 %v837
    %892 = vmatprep.subr.bf16.mxu0 0
    %893 = vmatpush1.bf16.msra.mxu0 0
    %894 = vmatprep.subr.bf16.mxu0 0
    %895 = vmatpush1.bf16.msra.mxu0 0
    %896 = vmatprep.subr.bf16.mxu0 0
    %897 = vmatpush1.bf16.msra.mxu0 0
    %898 = vmatprep.subr.bf16.mxu0 0
    %899 = vmatpush1.bf16.msra.mxu0 0
    %900 = vmatprep.subr.bf16.mxu0 0
    %901 = vmatpush1.bf16.msra.mxu0 0
    %902 = vmatprep.subr.bf16.mxu0 0
    %903 = vmatpush1.bf16.msra.mxu0 0
    %904 = vmatprep.subr.bf16.mxu0 0
    %905 = vmatpush1.bf16.msra.mxu0 0
    %906 = vmatprep.subr.bf16.mxu0 0
    %907 = vmatpush1.bf16.msra.mxu0 0
    %908 = vmatprep.subr.bf16.mxu0 0
    %909 = vmatpush1.bf16.msra.mxu0 0
    %910 = vmatprep.subr.bf16.mxu0 0
    %911 = vmatpush1.bf16.msra.mxu0 0
    %912 = vmatprep.subr.bf16.mxu0 0
    %913 = vmatpush1.bf16.msra.mxu0 0
    %914 = vmatprep.subr.bf16.mxu0 0
    %915 = vmatpush1.bf16.msra.mxu0 0
    %916 = vmatprep.subr.bf16.mxu0 0
    %917 = vmatpush1.bf16.msra.mxu0 0
    %918 = vmatprep.subr.bf16.mxu0 0
    %919 = vmatpush1.bf16.msra.mxu0 0
    %920 = vmatprep.subr.bf16.mxu0 0
    %921 = vmatpush1.bf16.msra.mxu0 0
    %922 = vmatprep.mubr.bf16.mxu0 0
    %923 = vmatmul.mubr.bf16.gmra.mrb[0].mxu0 %v845
    %v924 = vpop.f32.mrb[0].mxu0
    %v925 = vadd.f32 0.0, %v924
    %v926 = vpop.f32.mrb[0].mxu0
    %v927 = vadd.f32 0.0, %v926
    %v928 = vpop.f32.mrb[0].mxu0
    %v929 = vadd.f32 0.0, %v928
    %v930 = vpop.f32.mrb[0].mxu0
    %v931 = vadd.f32 0.0, %v930
    %932 = vdwg.mxu0
    %v933 = vadd.f32 %v824, %v882
    %v934 = vadd.f32 %v825, %v884
    %v935 = vadd.f32 %v826, %v925
    %v936 = vadd.f32 %v827, %v927
    %v937 = vadd.f32 %v828, %v886
    %v938 = vadd.f32 %v829, %v888
    %v939 = vadd.f32 %v830, %v929
    %v940 = vadd.f32 %v831, %v931
    %941 = vrot.lane.b32.xlu0 %v180, 127
    %v942 = vpop.permute.xlu0 %941
    %943 = vrot.lane.b32.xlu0 %v184, 127
    %v944 = vpop.permute.xlu0 %943
    %945 = vrot.lane.b32.xlu0 %v181, 127
    %v946 = vpop.permute.xlu0 %945
    %947 = vrot.lane.b32.xlu0 %v185, 127
    %v948 = vpop.permute.xlu0 %947
    %949 = vrot.lane.b32.xlu0 %v182, 127
    %v950 = vpop.permute.xlu0 %949
    %951 = vrot.lane.b32.xlu0 %v186, 127
    %v952 = vpop.permute.xlu0 %951
    %953 = vrot.lane.b32.xlu0 %v183, 127
    %v954 = vpop.permute.xlu0 %953
    %955 = vrot.lane.b32.xlu0 %v187, 127
    %v956 = vpop.permute.xlu0 %955
    %vm957 = vcmp.lt.s32.totalorder %v205, 127
    %v958 = vsel %vm957, %v950, %v954
    %v959 = vsel %vm957, %v952, %v956
    %v960 = vsel %vm957, %v946, %v950
    %v961 = vsel %vm957, %v948, %v952
    %v962 = vsel %vm957, %v942, %v946
    %v963 = vsel %vm957, %v944, %v948
    %v964 = vsel %vm957, %v954, %v942
    %v965 = vsel %vm957, %v956, %v944
    %s966 = scalar_lea.vmem %s1, 20
    %v967 = vld [vmem:[%s966] sm:$0xf]
    %v969 = vlaneseq
    %v970 = vshrl.u32 %v969, 7
    %v971 = vsub.s32 0, %v970
    %v972 = vrot.slane %v967, %v971
    %v973 = vlaneseq
    %v974 = vshrl.u32 %v973, 7
    %v975 = vsub.s32 1, %v974
    %v976 = vrot.slane %v967, %v975
    %v977 = vlaneseq
    %v978 = vshrl.u32 %v977, 7
    %v979 = vsub.s32 2, %v978
    %v980 = vrot.slane %v967, %v979
    %v981 = vlaneseq
    %v982 = vshrl.u32 %v981, 7
    %v983 = vsub.s32 3, %v982
    %v984 = vrot.slane %v967, %v983
    %v989 = vmul.f32 %v962, %v972
    %v990 = vmul.f32 %v960, %v976
    %v991 = vmul.f32 %v958, %v980
    %v992 = vmul.f32 %v964, %v984
    %v993 = vmul.f32 %v963, %v972
    %v994 = vmul.f32 %v961, %v976
    %v995 = vmul.f32 %v959, %v980
    %v996 = vmul.f32 %v965, %v984
    %s997 = scalar_lea.vmem [#allocation5], 40
    %v998 = vld [vmem:[%s997] sm:$0xf]
    %v999 = vld [vmem:[%s997 + $0x4] sm:$0xf]
    %v1000 = vpack.c.bf16 %v993, %v989
    %v1001 = vpack.c.bf16 %v994, %v990
    %v1002 = vpack.c.bf16 %v995, %v991
    %v1003 = vpack.c.bf16 %v996, %v992
    %v1006 = vunpack.c.l.b16 %v998
    %v1007 = vunpack.c.l.b16 %v999
    %v1008 = vpack.c.b16 %v1007, %v1006
    %v1010 = vsel %vm90, %v1008, 0
    %1012 = vmatprep.subr.bf16.mxu0 %v1001
    %1013 = vmatpush1.bf16.msra.mxu0 %v1000
    %1014 = vmatprep.subr.bf16.mxu0 0
    %1015 = vmatpush1.bf16.msra.mxu0 0
    %1016 = vmatprep.subr.bf16.mxu0 0
    %1017 = vmatpush1.bf16.msra.mxu0 0
    %1018 = vmatprep.subr.bf16.mxu0 0
    %1019 = vmatpush1.bf16.msra.mxu0 0
    %1020 = vmatprep.subr.bf16.mxu0 0
    %1021 = vmatpush1.bf16.msra.mxu0 0
    %1022 = vmatprep.subr.bf16.mxu0 0
    %1023 = vmatpush1.bf16.msra.mxu0 0
    %1024 = vmatprep.subr.bf16.mxu0 0
    %1025 = vmatpush1.bf16.msra.mxu0 0
    %1026 = vmatprep.subr.bf16.mxu0 0
    %1027 = vmatpush1.bf16.msra.mxu0 0
    %1028 = vmatprep.subr.bf16.mxu0 0
    %1029 = vmatpush1.bf16.msra.mxu0 0
    %1030 = vmatprep.subr.bf16.mxu0 0
    %1031 = vmatpush1.bf16.msra.mxu0 0
    %1032 = vmatprep.subr.bf16.mxu0 0
    %1033 = vmatpush1.bf16.msra.mxu0 0
    %1034 = vmatprep.subr.bf16.mxu0 0
    %1035 = vmatpush1.bf16.msra.mxu0 0
    %1036 = vmatprep.subr.bf16.mxu0 0
    %1037 = vmatpush1.bf16.msra.mxu0 0
    %1038 = vmatprep.subr.bf16.mxu0 0
    %1039 = vmatpush1.bf16.msra.mxu0 0
    %1040 = vmatprep.subr.bf16.mxu0 0
    %1041 = vmatpush1.bf16.msra.mxu0 0
    %1042 = vmatprep.subr.bf16.mxu0 0
    %1043 = vmatpush1.bf16.msra.mxu0 0
    %1044 = vmatprep.mubr.bf16.mxu0 0
    %1045 = vmatmul.mubr.bf16.gmra.mrb[0].mxu0 %v1010
    %v1046 = vpop.f32.mrb[0].mxu0
    %v1047 = vadd.f32 0.0, %v1046
    %v1048 = vpop.f32.mrb[0].mxu0
    %v1049 = vadd.f32 0.0, %v1048
    %v1050 = vpop.f32.mrb[0].mxu0
    %v1051 = vadd.f32 0.0, %v1050
    %v1052 = vpop.f32.mrb[0].mxu0
    %v1053 = vadd.f32 0.0, %v1052
    %1054 = vdwg.mxu0
    %1055 = vmatprep.subr.bf16.mxu0 %v1003
    %1056 = vmatpush1.bf16.msra.mxu0 %v1002
    %1057 = vmatprep.subr.bf16.mxu0 0
    %1058 = vmatpush1.bf16.msra.mxu0 0
    %1059 = vmatprep.subr.bf16.mxu0 0
    %1060 = vmatpush1.bf16.msra.mxu0 0
    %1061 = vmatprep.subr.bf16.mxu0 0
    %1062 = vmatpush1.bf16.msra.mxu0 0
    %1063 = vmatprep.subr.bf16.mxu0 0
    %1064 = vmatpush1.bf16.msra.mxu0 0
    %1065 = vmatprep.subr.bf16.mxu0 0
    %1066 = vmatpush1.bf16.msra.mxu0 0
    %1067 = vmatprep.subr.bf16.mxu0 0
    %1068 = vmatpush1.bf16.msra.mxu0 0
    %1069 = vmatprep.subr.bf16.mxu0 0
    %1070 = vmatpush1.bf16.msra.mxu0 0
    %1071 = vmatprep.subr.bf16.mxu0 0
    %1072 = vmatpush1.bf16.msra.mxu0 0
    %1073 = vmatprep.subr.bf16.mxu0 0
    %1074 = vmatpush1.bf16.msra.mxu0 0
    %1075 = vmatprep.subr.bf16.mxu0 0
    %1076 = vmatpush1.bf16.msra.mxu0 0
    %1077 = vmatprep.subr.bf16.mxu0 0
    %1078 = vmatpush1.bf16.msra.mxu0 0
    %1079 = vmatprep.subr.bf16.mxu0 0
    %1080 = vmatpush1.bf16.msra.mxu0 0
    %1081 = vmatprep.subr.bf16.mxu0 0
    %1082 = vmatpush1.bf16.msra.mxu0 0
    %1083 = vmatprep.subr.bf16.mxu0 0
    %1084 = vmatpush1.bf16.msra.mxu0 0
    %1085 = vmatprep.subr.bf16.mxu0 0
    %1086 = vmatpush1.bf16.msra.mxu0 0
    %1087 = vmatprep.mubr.bf16.mxu0 0
    %1088 = vmatmul.mubr.bf16.gmra.mrb[0].mxu0 %v1010
    %v1089 = vpop.f32.mrb[0].mxu0
    %v1090 = vadd.f32 0.0, %v1089
    %v1091 = vpop.f32.mrb[0].mxu0
    %v1092 = vadd.f32 0.0, %v1091
    %v1093 = vpop.f32.mrb[0].mxu0
    %v1094 = vadd.f32 0.0, %v1093
    %v1095 = vpop.f32.mrb[0].mxu0
    %v1096 = vadd.f32 0.0, %v1095
    %1097 = vdwg.mxu0
    %v1098 = vadd.f32 %v933, %v1047
    %v1099 = vadd.f32 %v934, %v1049
    %v1100 = vadd.f32 %v935, %v1090
    %v1101 = vadd.f32 %v936, %v1092
    %v1102 = vadd.f32 %v937, %v1051
    %v1103 = vadd.f32 %v938, %v1053
    %v1104 = vadd.f32 %v939, %v1094
    %v1105 = vadd.f32 %v940, %v1096
    %1106 = vrot.lane.b32.xlu0 %v180, 113
    %v1107 = vpop.permute.xlu0 %1106
    %1108 = vrot.lane.b32.xlu0 %v184, 113
    %v1109 = vpop.permute.xlu0 %1108
    %1110 = vrot.lane.b32.xlu0 %v181, 113
    %v1111 = vpop.permute.xlu0 %1110
    %1112 = vrot.lane.b32.xlu0 %v185, 113
    %v1113 = vpop.permute.xlu0 %1112
    %1114 = vrot.lane.b32.xlu0 %v182, 113
    %v1115 = vpop.permute.xlu0 %1114
    %1116 = vrot.lane.b32.xlu0 %v186, 113
    %v1117 = vpop.permute.xlu0 %1116
    %1118 = vrot.lane.b32.xlu0 %v183, 113
    %v1119 = vpop.permute.xlu0 %1118
    %1120 = vrot.lane.b32.xlu0 %v187, 113
    %v1121 = vpop.permute.xlu0 %1120
    %vm1122 = vcmp.lt.s32.totalorder %v205, 113
    %v1123 = vsel %vm1122, %v1115, %v1119
    %v1124 = vsel %vm1122, %v1117, %v1121
    %v1125 = vsel %vm1122, %v1111, %v1115
    %v1126 = vsel %vm1122, %v1113, %v1117
    %v1127 = vsel %vm1122, %v1107, %v1111
    %v1128 = vsel %vm1122, %v1109, %v1113
    %v1129 = vsel %vm1122, %v1119, %v1107
    %v1130 = vsel %vm1122, %v1121, %v1109
    %s1131 = scalar_lea.vmem %s1, 24
    %v1132 = vld [vmem:[%s1131] sm:$0xf]
    %v1134 = vlaneseq
    %v1135 = vshrl.u32 %v1134, 7
    %v1136 = vsub.s32 0, %v1135
    %v1137 = vrot.slane %v1132, %v1136
    %v1138 = vlaneseq
    %v1139 = vshrl.u32 %v1138, 7
    %v1140 = vsub.s32 1, %v1139
    %v1141 = vrot.slane %v1132, %v1140
    %v1142 = vlaneseq
    %v1143 = vshrl.u32 %v1142, 7
    %v1144 = vsub.s32 2, %v1143
    %v1145 = vrot.slane %v1132, %v1144
    %v1146 = vlaneseq
    %v1147 = vshrl.u32 %v1146, 7
    %v1148 = vsub.s32 3, %v1147
    %v1149 = vrot.slane %v1132, %v1148
    %v1154 = vmul.f32 %v1127, %v1137
    %v1155 = vmul.f32 %v1125, %v1141
    %v1156 = vmul.f32 %v1123, %v1145
    %v1157 = vmul.f32 %v1129, %v1149
    %v1158 = vmul.f32 %v1128, %v1137
    %v1159 = vmul.f32 %v1126, %v1141
    %v1160 = vmul.f32 %v1124, %v1145
    %v1161 = vmul.f32 %v1130, %v1149
    %s1162 = scalar_lea.vmem [#allocation5], 48
    %v1163 = vld [vmem:[%s1162] sm:$0xf]
    %v1164 = vld [vmem:[%s1162 + $0x4] sm:$0xf]
    %v1165 = vpack.c.bf16 %v1158, %v1154
    %v1166 = vpack.c.bf16 %v1159, %v1155
    %v1167 = vpack.c.bf16 %v1160, %v1156
    %v1168 = vpack.c.bf16 %v1161, %v1157
    %v1171 = vunpack.c.l.b16 %v1163
    %v1172 = vunpack.c.l.b16 %v1164
    %v1173 = vpack.c.b16 %v1172, %v1171
    %v1175 = vsel %vm90, %v1173, 0
    %1177 = vmatprep.subr.bf16.mxu0 %v1166
    %1178 = vmatpush1.bf16.msra.mxu0 %v1165
    %1179 = vmatprep.subr.bf16.mxu0 0
    %1180 = vmatpush1.bf16.msra.mxu0 0
    %1181 = vmatprep.subr.bf16.mxu0 0
    %1182 = vmatpush1.bf16.msra.mxu0 0
    %1183 = vmatprep.subr.bf16.mxu0 0
    %1184 = vmatpush1.bf16.msra.mxu0 0
    %1185 = vmatprep.subr.bf16.mxu0 0
    %1186 = vmatpush1.bf16.msra.mxu0 0
    %1187 = vmatprep.subr.bf16.mxu0 0
    %1188 = vmatpush1.bf16.msra.mxu0 0
    %1189 = vmatprep.subr.bf16.mxu0 0
    %1190 = vmatpush1.bf16.msra.mxu0 0
    %1191 = vmatprep.subr.bf16.mxu0 0
    %1192 = vmatpush1.bf16.msra.mxu0 0
    %1193 = vmatprep.subr.bf16.mxu0 0
    %1194 = vmatpush1.bf16.msra.mxu0 0
    %1195 = vmatprep.subr.bf16.mxu0 0
    %1196 = vmatpush1.bf16.msra.mxu0 0
    %1197 = vmatprep.subr.bf16.mxu0 0
    %1198 = vmatpush1.bf16.msra.mxu0 0
    %1199 = vmatprep.subr.bf16.mxu0 0
    %1200 = vmatpush1.bf16.msra.mxu0 0
    %1201 = vmatprep.subr.bf16.mxu0 0
    %1202 = vmatpush1.bf16.msra.mxu0 0
    %1203 = vmatprep.subr.bf16.mxu0 0
    %1204 = vmatpush1.bf16.msra.mxu0 0
    %1205 = vmatprep.subr.bf16.mxu0 0
    %1206 = vmatpush1.bf16.msra.mxu0 0
    %1207 = vmatprep.subr.bf16.mxu0 0
    %1208 = vmatpush1.bf16.msra.mxu0 0
    %1209 = vmatprep.mubr.bf16.mxu0 0
    %1210 = vmatmul.mubr.bf16.gmra.mrb[0].mxu0 %v1175
    %v1211 = vpop.f32.mrb[0].mxu0
    %v1212 = vadd.f32 0.0, %v1211
    %v1213 = vpop.f32.mrb[0].mxu0
    %v1214 = vadd.f32 0.0, %v1213
    %v1215 = vpop.f32.mrb[0].mxu0
    %v1216 = vadd.f32 0.0, %v1215
    %v1217 = vpop.f32.mrb[0].mxu0
    %v1218 = vadd.f32 0.0, %v1217
    %1219 = vdwg.mxu0
    %1220 = vmatprep.subr.bf16.mxu0 %v1168
    %1221 = vmatpush1.bf16.msra.mxu0 %v1167
    %1222 = vmatprep.subr.bf16.mxu0 0
    %1223 = vmatpush1.bf16.msra.mxu0 0
    %1224 = vmatprep.subr.bf16.mxu0 0
    %1225 = vmatpush1.bf16.msra.mxu0 0
    %1226 = vmatprep.subr.bf16.mxu0 0
    %1227 = vmatpush1.bf16.msra.mxu0 0
    %1228 = vmatprep.subr.bf16.mxu0 0
    %1229 = vmatpush1.bf16.msra.mxu0 0
    %1230 = vmatprep.subr.bf16.mxu0 0
    %1231 = vmatpush1.bf16.msra.mxu0 0
    %1232 = vmatprep.subr.bf16.mxu0 0
    %1233 = vmatpush1.bf16.msra.mxu0 0
    %1234 = vmatprep.subr.bf16.mxu0 0
    %1235 = vmatpush1.bf16.msra.mxu0 0
    %1236 = vmatprep.subr.bf16.mxu0 0
    %1237 = vmatpush1.bf16.msra.mxu0 0
    %1238 = vmatprep.subr.bf16.mxu0 0
    %1239 = vmatpush1.bf16.msra.mxu0 0
    %1240 = vmatprep.subr.bf16.mxu0 0
    %1241 = vmatpush1.bf16.msra.mxu0 0
    %1242 = vmatprep.subr.bf16.mxu0 0
    %1243 = vmatpush1.bf16.msra.mxu0 0
    %1244 = vmatprep.subr.bf16.mxu0 0
    %1245 = vmatpush1.bf16.msra.mxu0 0
    %1246 = vmatprep.subr.bf16.mxu0 0
    %1247 = vmatpush1.bf16.msra.mxu0 0
    %1248 = vmatprep.subr.bf16.mxu0 0
    %1249 = vmatpush1.bf16.msra.mxu0 0
    %1250 = vmatprep.subr.bf16.mxu0 0
    %1251 = vmatpush1.bf16.msra.mxu0 0
    %1252 = vmatprep.mubr.bf16.mxu0 0
    %1253 = vmatmul.mubr.bf16.gmra.mrb[0].mxu0 %v1175
    %v1254 = vpop.f32.mrb[0].mxu0
    %v1255 = vadd.f32 0.0, %v1254
    %v1256 = vpop.f32.mrb[0].mxu0
    %v1257 = vadd.f32 0.0, %v1256
    %v1258 = vpop.f32.mrb[0].mxu0
    %v1259 = vadd.f32 0.0, %v1258
    %v1260 = vpop.f32.mrb[0].mxu0
    %v1261 = vadd.f32 0.0, %v1260
    %1262 = vdwg.mxu0
    %v1263 = vadd.f32 %v1098, %v1212
    %v1264 = vadd.f32 %v1099, %v1214
    %v1265 = vadd.f32 %v1100, %v1255
    %v1266 = vadd.f32 %v1101, %v1257
    %v1267 = vadd.f32 %v1102, %v1216
    %v1268 = vadd.f32 %v1103, %v1218
    %v1269 = vadd.f32 %v1104, %v1259
    %v1270 = vadd.f32 %v1105, %v1261
    %1271 = vrot.lane.b32.xlu0 %v180, 112
    %v1272 = vpop.permute.xlu0 %1271
    %1273 = vrot.lane.b32.xlu0 %v184, 112
    %v1274 = vpop.permute.xlu0 %1273
    %1275 = vrot.lane.b32.xlu0 %v181, 112
    %v1276 = vpop.permute.xlu0 %1275
    %1277 = vrot.lane.b32.xlu0 %v185, 112
    %v1278 = vpop.permute.xlu0 %1277
    %1279 = vrot.lane.b32.xlu0 %v182, 112
    %v1280 = vpop.permute.xlu0 %1279
    %1281 = vrot.lane.b32.xlu0 %v186, 112
    %v1282 = vpop.permute.xlu0 %1281
    %1283 = vrot.lane.b32.xlu0 %v183, 112
    %v1284 = vpop.permute.xlu0 %1283
    %1285 = vrot.lane.b32.xlu0 %v187, 112
    %v1286 = vpop.permute.xlu0 %1285
    %vm1287 = vcmp.lt.s32.totalorder %v205, 112
    %v1288 = vsel %vm1287, %v1280, %v1284
    %v1289 = vsel %vm1287, %v1282, %v1286
    %v1290 = vsel %vm1287, %v1276, %v1280
    %v1291 = vsel %vm1287, %v1278, %v1282
    %v1292 = vsel %vm1287, %v1272, %v1276
    %v1293 = vsel %vm1287, %v1274, %v1278
    %v1294 = vsel %vm1287, %v1284, %v1272
    %v1295 = vsel %vm1287, %v1286, %v1274
    %s1296 = scalar_lea.vmem %s1, 28
    %v1297 = vld [vmem:[%s1296] sm:$0xf]
    %v1299 = vlaneseq
    %v1300 = vshrl.u32 %v1299, 7
    %v1301 = vsub.s32 0, %v1300
    %v1302 = vrot.slane %v1297, %v1301
    %v1303 = vlaneseq
    %v1304 = vshrl.u32 %v1303, 7
    %v1305 = vsub.s32 1, %v1304
    %v1306 = vrot.slane %v1297, %v1305
    %v1307 = vlaneseq
    %v1308 = vshrl.u32 %v1307, 7
    %v1309 = vsub.s32 2, %v1308
    %v1310 = vrot.slane %v1297, %v1309
    %v1311 = vlaneseq
    %v1312 = vshrl.u32 %v1311, 7
    %v1313 = vsub.s32 3, %v1312
    %v1314 = vrot.slane %v1297, %v1313
    %v1319 = vmul.f32 %v1292, %v1302
    %v1320 = vmul.f32 %v1290, %v1306
    %v1321 = vmul.f32 %v1288, %v1310
    %v1322 = vmul.f32 %v1294, %v1314
    %v1323 = vmul.f32 %v1293, %v1302
    %v1324 = vmul.f32 %v1291, %v1306
    %v1325 = vmul.f32 %v1289, %v1310
    %v1326 = vmul.f32 %v1295, %v1314
    %s1327 = scalar_lea.vmem [#allocation5], 56
    %v1328 = vld [vmem:[%s1327] sm:$0xf]
    %v1329 = vld [vmem:[%s1327 + $0x4] sm:$0xf]
    %v1330 = vpack.c.bf16 %v1323, %v1319
    %v1331 = vpack.c.bf16 %v1324, %v1320
    %v1332 = vpack.c.bf16 %v1325, %v1321
    %v1333 = vpack.c.bf16 %v1326, %v1322
    %v1336 = vunpack.c.l.b16 %v1328
    %v1337 = vunpack.c.l.b16 %v1329
    %v1338 = vpack.c.b16 %v1337, %v1336
    %v1340 = vsel %vm90, %v1338, 0
    %1342 = vmatprep.subr.bf16.mxu0 %v1331
    %1343 = vmatpush1.bf16.msra.mxu0 %v1330
    %1344 = vmatprep.subr.bf16.mxu0 0
    %1345 = vmatpush1.bf16.msra.mxu0 0
    %1346 = vmatprep.subr.bf16.mxu0 0
    %1347 = vmatpush1.bf16.msra.mxu0 0
    %1348 = vmatprep.subr.bf16.mxu0 0
    %1349 = vmatpush1.bf16.msra.mxu0 0
    %1350 = vmatprep.subr.bf16.mxu0 0
    %1351 = vmatpush1.bf16.msra.mxu0 0
    %1352 = vmatprep.subr.bf16.mxu0 0
    %1353 = vmatpush1.bf16.msra.mxu0 0
    %1354 = vmatprep.subr.bf16.mxu0 0
    %1355 = vmatpush1.bf16.msra.mxu0 0
    %1356 = vmatprep.subr.bf16.mxu0 0
    %1357 = vmatpush1.bf16.msra.mxu0 0
    %1358 = vmatprep.subr.bf16.mxu0 0
    %1359 = vmatpush1.bf16.msra.mxu0 0
    %1360 = vmatprep.subr.bf16.mxu0 0
    %1361 = vmatpush1.bf16.msra.mxu0 0
    %1362 = vmatprep.subr.bf16.mxu0 0
    %1363 = vmatpush1.bf16.msra.mxu0 0
    %1364 = vmatprep.subr.bf16.mxu0 0
    %1365 = vmatpush1.bf16.msra.mxu0 0
    %1366 = vmatprep.subr.bf16.mxu0 0
    %1367 = vmatpush1.bf16.msra.mxu0 0
    %1368 = vmatprep.subr.bf16.mxu0 0
    %1369 = vmatpush1.bf16.msra.mxu0 0
    %1370 = vmatprep.subr.bf16.mxu0 0
    %1371 = vmatpush1.bf16.msra.mxu0 0
    %1372 = vmatprep.subr.bf16.mxu0 0
    %1373 = vmatpush1.bf16.msra.mxu0 0
    %1374 = vmatprep.mubr.bf16.mxu0 0
    %1375 = vmatmul.mubr.bf16.gmra.mrb[0].mxu0 %v1340
    %v1376 = vpop.f32.mrb[0].mxu0
    %v1377 = vadd.f32 0.0, %v1376
    %v1378 = vpop.f32.mrb[0].mxu0
    %v1379 = vadd.f32 0.0, %v1378
    %v1380 = vpop.f32.mrb[0].mxu0
    %v1381 = vadd.f32 0.0, %v1380
    %v1382 = vpop.f32.mrb[0].mxu0
    %v1383 = vadd.f32 0.0, %v1382
    %1384 = vdwg.mxu0
    %1385 = vmatprep.subr.bf16.mxu0 %v1333
    %1386 = vmatpush1.bf16.msra.mxu0 %v1332
    %1387 = vmatprep.subr.bf16.mxu0 0
    %1388 = vmatpush1.bf16.msra.mxu0 0
    %1389 = vmatprep.subr.bf16.mxu0 0
    %1390 = vmatpush1.bf16.msra.mxu0 0
    %1391 = vmatprep.subr.bf16.mxu0 0
    %1392 = vmatpush1.bf16.msra.mxu0 0
    %1393 = vmatprep.subr.bf16.mxu0 0
    %1394 = vmatpush1.bf16.msra.mxu0 0
    %1395 = vmatprep.subr.bf16.mxu0 0
    %1396 = vmatpush1.bf16.msra.mxu0 0
    %1397 = vmatprep.subr.bf16.mxu0 0
    %1398 = vmatpush1.bf16.msra.mxu0 0
    %1399 = vmatprep.subr.bf16.mxu0 0
    %1400 = vmatpush1.bf16.msra.mxu0 0
    %1401 = vmatprep.subr.bf16.mxu0 0
    %1402 = vmatpush1.bf16.msra.mxu0 0
    %1403 = vmatprep.subr.bf16.mxu0 0
    %1404 = vmatpush1.bf16.msra.mxu0 0
    %1405 = vmatprep.subr.bf16.mxu0 0
    %1406 = vmatpush1.bf16.msra.mxu0 0
    %1407 = vmatprep.subr.bf16.mxu0 0
    %1408 = vmatpush1.bf16.msra.mxu0 0
    %1409 = vmatprep.subr.bf16.mxu0 0
    %1410 = vmatpush1.bf16.msra.mxu0 0
    %1411 = vmatprep.subr.bf16.mxu0 0
    %1412 = vmatpush1.bf16.msra.mxu0 0
    %1413 = vmatprep.subr.bf16.mxu0 0
    %1414 = vmatpush1.bf16.msra.mxu0 0
    %1415 = vmatprep.subr.bf16.mxu0 0
    %1416 = vmatpush1.bf16.msra.mxu0 0
    %1417 = vmatprep.mubr.bf16.mxu0 0
    %1418 = vmatmul.mubr.bf16.gmra.mrb[0].mxu0 %v1340
    %v1419 = vpop.f32.mrb[0].mxu0
    %v1420 = vadd.f32 0.0, %v1419
    %v1421 = vpop.f32.mrb[0].mxu0
    %v1422 = vadd.f32 0.0, %v1421
    %v1423 = vpop.f32.mrb[0].mxu0
    %v1424 = vadd.f32 0.0, %v1423
    %v1425 = vpop.f32.mrb[0].mxu0
    %v1426 = vadd.f32 0.0, %v1425
    %1427 = vdwg.mxu0
    %v1428 = vadd.f32 %v1263, %v1377
    %v1429 = vadd.f32 %v1264, %v1379
    %v1430 = vadd.f32 %v1265, %v1420
    %v1431 = vadd.f32 %v1266, %v1422
    %v1432 = vadd.f32 %v1267, %v1381
    %v1433 = vadd.f32 %v1268, %v1383
    %v1434 = vadd.f32 %v1269, %v1424
    %v1435 = vadd.f32 %v1270, %v1426
    %1436 = vrot.lane.b32.xlu0 %v180, 111
    %v1437 = vpop.permute.xlu0 %1436
    %1438 = vrot.lane.b32.xlu0 %v184, 111
    %v1439 = vpop.permute.xlu0 %1438
    %1440 = vrot.lane.b32.xlu0 %v181, 111
    %v1441 = vpop.permute.xlu0 %1440
    %1442 = vrot.lane.b32.xlu0 %v185, 111
    %v1443 = vpop.permute.xlu0 %1442
    %1444 = vrot.lane.b32.xlu0 %v182, 111
    %v1445 = vpop.permute.xlu0 %1444
    %1446 = vrot.lane.b32.xlu0 %v186, 111
    %v1447 = vpop.permute.xlu0 %1446
    %1448 = vrot.lane.b32.xlu0 %v183, 111
    %v1449 = vpop.permute.xlu0 %1448
    %1450 = vrot.lane.b32.xlu0 %v187, 111
    %v1451 = vpop.permute.xlu0 %1450
    %vm1452 = vcmp.lt.s32.totalorder %v205, 111
    %v1453 = vsel %vm1452, %v1445, %v1449
    %v1454 = vsel %vm1452, %v1447, %v1451
    %v1455 = vsel %vm1452, %v1441, %v1445
    %v1456 = vsel %vm1452, %v1443, %v1447
    %v1457 = vsel %vm1452, %v1437, %v1441
    %v1458 = vsel %vm1452, %v1439, %v1443
    %v1459 = vsel %vm1452, %v1449, %v1437
    %v1460 = vsel %vm1452, %v1451, %v1439
    %s1461 = scalar_lea.vmem %s1, 32
    %v1462 = vld [vmem:[%s1461] sm:$0xf]
    %v1464 = vlaneseq
    %v1465 = vshrl.u32 %v1464, 7
    %v1466 = vsub.s32 0, %v1465
    %v1467 = vrot.slane %v1462, %v1466
    %v1468 = vlaneseq
    %v1469 = vshrl.u32 %v1468, 7
    %v1470 = vsub.s32 1, %v1469
    %v1471 = vrot.slane %v1462, %v1470
    %v1472 = vlaneseq
    %v1473 = vshrl.u32 %v1472, 7
    %v1474 = vsub.s32 2, %v1473
    %v1475 = vrot.slane %v1462, %v1474
    %v1476 = vlaneseq
    %v1477 = vshrl.u32 %v1476, 7
    %v1478 = vsub.s32 3, %v1477
    %v1479 = vrot.slane %v1462, %v1478
    %v1484 = vmul.f32 %v1457, %v1467
    %v1485 = vmul.f32 %v1455, %v1471
    %v1486 = vmul.f32 %v1453, %v1475
    %v1487 = vmul.f32 %v1459, %v1479
    %v1488 = vmul.f32 %v1458, %v1467
    %v1489 = vmul.f32 %v1456, %v1471
    %v1490 = vmul.f32 %v1454, %v1475
    %v1491 = vmul.f32 %v1460, %v1479
    %s1492 = scalar_lea.vmem [#allocation5], 64
    %v1493 = vld [vmem:[%s1492] sm:$0xf]
    %v1494 = vld [vmem:[%s1492 + $0x4] sm:$0xf]
    %v1495 = vpack.c.bf16 %v1488, %v1484
    %v1496 = vpack.c.bf16 %v1489, %v1485
    %v1497 = vpack.c.bf16 %v1490, %v1486
    %v1498 = vpack.c.bf16 %v1491, %v1487
    %v1501 = vunpack.c.l.b16 %v1493
    %v1502 = vunpack.c.l.b16 %v1494
    %v1503 = vpack.c.b16 %v1502, %v1501
    %v1505 = vsel %vm90, %v1503, 0
    %1507 = vmatprep.subr.bf16.mxu0 %v1496
    %1508 = vmatpush1.bf16.msra.mxu0 %v1495
    %1509 = vmatprep.subr.bf16.mxu0 0
    %1510 = vmatpush1.bf16.msra.mxu0 0
    %1511 = vmatprep.subr.bf16.mxu0 0
    %1512 = vmatpush1.bf16.msra.mxu0 0
    %1513 = vmatprep.subr.bf16.mxu0 0
    %1514 = vmatpush1.bf16.msra.mxu0 0
    %1515 = vmatprep.subr.bf16.mxu0 0
    %1516 = vmatpush1.bf16.msra.mxu0 0
    %1517 = vmatprep.subr.bf16.mxu0 0
    %1518 = vmatpush1.bf16.msra.mxu0 0
    %1519 = vmatprep.subr.bf16.mxu0 0
    %1520 = vmatpush1.bf16.msra.mxu0 0
    %1521 = vmatprep.subr.bf16.mxu0 0
    %1522 = vmatpush1.bf16.msra.mxu0 0
    %1523 = vmatprep.subr.bf16.mxu0 0
    %1524 = vmatpush1.bf16.msra.mxu0 0
    %1525 = vmatprep.subr.bf16.mxu0 0
    %1526 = vmatpush1.bf16.msra.mxu0 0
    %1527 = vmatprep.subr.bf16.mxu0 0
    %1528 = vmatpush1.bf16.msra.mxu0 0
    %1529 = vmatprep.subr.bf16.mxu0 0
    %1530 = vmatpush1.bf16.msra.mxu0 0
    %1531 = vmatprep.subr.bf16.mxu0 0
    %1532 = vmatpush1.bf16.msra.mxu0 0
    %1533 = vmatprep.subr.bf16.mxu0 0
    %1534 = vmatpush1.bf16.msra.mxu0 0
    %1535 = vmatprep.subr.bf16.mxu0 0
    %1536 = vmatpush1.bf16.msra.mxu0 0
    %1537 = vmatprep.subr.bf16.mxu0 0
    %1538 = vmatpush1.bf16.msra.mxu0 0
    %1539 = vmatprep.mubr.bf16.mxu0 0
    %1540 = vmatmul.mubr.bf16.gmra.mrb[0].mxu0 %v1505
    %v1541 = vpop.f32.mrb[0].mxu0
    %v1542 = vadd.f32 0.0, %v1541
    %v1543 = vpop.f32.mrb[0].mxu0
    %v1544 = vadd.f32 0.0, %v1543
    %v1545 = vpop.f32.mrb[0].mxu0
    %v1546 = vadd.f32 0.0, %v1545
    %v1547 = vpop.f32.mrb[0].mxu0
    %v1548 = vadd.f32 0.0, %v1547
    %1549 = vdwg.mxu0
    %1550 = vmatprep.subr.bf16.mxu0 %v1498
    %1551 = vmatpush1.bf16.msra.mxu0 %v1497
    %1552 = vmatprep.subr.bf16.mxu0 0
    %1553 = vmatpush1.bf16.msra.mxu0 0
    %1554 = vmatprep.subr.bf16.mxu0 0
    %1555 = vmatpush1.bf16.msra.mxu0 0
    %1556 = vmatprep.subr.bf16.mxu0 0
    %1557 = vmatpush1.bf16.msra.mxu0 0
    %1558 = vmatprep.subr.bf16.mxu0 0
    %1559 = vmatpush1.bf16.msra.mxu0 0
    %1560 = vmatprep.subr.bf16.mxu0 0
    %1561 = vmatpush1.bf16.msra.mxu0 0
    %1562 = vmatprep.subr.bf16.mxu0 0
    %1563 = vmatpush1.bf16.msra.mxu0 0
    %1564 = vmatprep.subr.bf16.mxu0 0
    %1565 = vmatpush1.bf16.msra.mxu0 0
    %1566 = vmatprep.subr.bf16.mxu0 0
    %1567 = vmatpush1.bf16.msra.mxu0 0
    %1568 = vmatprep.subr.bf16.mxu0 0
    %1569 = vmatpush1.bf16.msra.mxu0 0
    %1570 = vmatprep.subr.bf16.mxu0 0
    %1571 = vmatpush1.bf16.msra.mxu0 0
    %1572 = vmatprep.subr.bf16.mxu0 0
    %1573 = vmatpush1.bf16.msra.mxu0 0
    %1574 = vmatprep.subr.bf16.mxu0 0
    %1575 = vmatpush1.bf16.msra.mxu0 0
    %1576 = vmatprep.subr.bf16.mxu0 0
    %1577 = vmatpush1.bf16.msra.mxu0 0
    %1578 = vmatprep.subr.bf16.mxu0 0
    %1579 = vmatpush1.bf16.msra.mxu0 0
    %1580 = vmatprep.subr.bf16.mxu0 0
    %1581 = vmatpush1.bf16.msra.mxu0 0
    %1582 = vmatprep.mubr.bf16.mxu0 0
    %1583 = vmatmul.mubr.bf16.gmra.mrb[0].mxu0 %v1505
    %v1584 = vpop.f32.mrb[0].mxu0
    %v1585 = vadd.f32 0.0, %v1584
    %v1586 = vpop.f32.mrb[0].mxu0
    %v1587 = vadd.f32 0.0, %v1586
    %v1588 = vpop.f32.mrb[0].mxu0
    %v1589 = vadd.f32 0.0, %v1588
    %v1590 = vpop.f32.mrb[0].mxu0
    %v1591 = vadd.f32 0.0, %v1590
    %1592 = vdwg.mxu0
    %v1593 = vadd.f32 %v1428, %v1542
    %v1594 = vadd.f32 %v1429, %v1544
    %v1595 = vadd.f32 %v1430, %v1585
    %v1596 = vadd.f32 %v1431, %v1587
    %v1597 = vadd.f32 %v1432, %v1546
    %v1598 = vadd.f32 %v1433, %v1548
    %v1599 = vadd.f32 %v1434, %v1589
    %v1600 = vadd.f32 %v1435, %v1591
    %1602 = vset.pattern.permute.xlu0 0
    %1603 = vperm.xlu0 %1602, %v64
    %v1604 = vpop.permute.xlu0 %1603
    %1607 = vset.pattern.permute.xlu0 0
    %1608 = vperm.xlu0 %1607, %v65
    %v1609 = vpop.permute.xlu0 %1608
    %v1611 = vadd.f32 %v1593, %v1604
    %v1612 = vadd.f32 %v1594, %v1604
    %v1613 = vadd.f32 %v1595, %v1604
    %v1614 = vadd.f32 %v1596, %v1604
    %v1615 = vadd.f32 %v1597, %v1609
    %v1616 = vadd.f32 %v1598, %v1609
    %v1617 = vadd.f32 %v1599, %v1609
    %v1618 = vadd.f32 %v1600, %v1609
    %v1619 = vmax.f32 %v1611, 0.0
    %v1620 = vmax.f32 %v1612, 0.0
    %v1621 = vmax.f32 %v1613, 0.0
    %v1622 = vmax.f32 %v1614, 0.0
    %v1623 = vmax.f32 %v1615, 0.0
    %v1624 = vmax.f32 %v1616, 0.0
    %v1625 = vmax.f32 %v1617, 0.0
    %v1626 = vmax.f32 %v1618, 0.0
    %v1627 = vld [vmem:[%s4] sm:$0xf]
    %v1628 = vld [vmem:[%s4 + $0x4] sm:$0xf]
    %v1629 = vpack.c.bf16 %v1623, %v1619
    %v1630 = vpack.c.bf16 %v1624, %v1620
    %v1631 = vpack.c.bf16 %v1625, %v1621
    %v1632 = vpack.c.bf16 %v1626, %v1622
    %1634 = vset.pattern.permute.xlu0 0
    %1635 = vperm.xlu0 %1634, %v67
    %v1636 = vpop.permute.xlu0 %1635
    %1639 = vset.pattern.permute.xlu0 0
    %1640 = vperm.xlu0 %1639, %v68
    %v1641 = vpop.permute.xlu0 %1640
    %v1645 = vunpack.c.l.b16 %v1627
    %v1646 = vunpack.c.l.b16 %v1628
    %v1647 = vpack.c.b16 %v1646, %v1645
    %v1649 = vsel %vm90, %v1647, 0
    %1651 = vmatprep.subr.bf16.mxu0 %v1630
    %1652 = vmatpush1.bf16.msra.mxu0 %v1629
    %1653 = vmatprep.subr.bf16.mxu0 0
    %1654 = vmatpush1.bf16.msra.mxu0 0
    %1655 = vmatprep.subr.bf16.mxu0 0
    %1656 = vmatpush1.bf16.msra.mxu0 0
    %1657 = vmatprep.subr.bf16.mxu0 0
    %1658 = vmatpush1.bf16.msra.mxu0 0
    %1659 = vmatprep.subr.bf16.mxu0 0
    %1660 = vmatpush1.bf16.msra.mxu0 0
    %1661 = vmatprep.subr.bf16.mxu0 0
    %1662 = vmatpush1.bf16.msra.mxu0 0
    %1663 = vmatprep.subr.bf16.mxu0 0
    %1664 = vmatpush1.bf16.msra.mxu0 0
    %1665 = vmatprep.subr.bf16.mxu0 0
    %1666 = vmatpush1.bf16.msra.mxu0 0
    %1667 = vmatprep.subr.bf16.mxu0 0
    %1668 = vmatpush1.bf16.msra.mxu0 0
    %1669 = vmatprep.subr.bf16.mxu0 0
    %1670 = vmatpush1.bf16.msra.mxu0 0
    %1671 = vmatprep.subr.bf16.mxu0 0
    %1672 = vmatpush1.bf16.msra.mxu0 0
    %1673 = vmatprep.subr.bf16.mxu0 0
    %1674 = vmatpush1.bf16.msra.mxu0 0
    %1675 = vmatprep.subr.bf16.mxu0 0
    %1676 = vmatpush1.bf16.msra.mxu0 0
    %1677 = vmatprep.subr.bf16.mxu0 0
    %1678 = vmatpush1.bf16.msra.mxu0 0
    %1679 = vmatprep.subr.bf16.mxu0 0
    %1680 = vmatpush1.bf16.msra.mxu0 0
    %1681 = vmatprep.subr.bf16.mxu0 0
    %1682 = vmatpush1.bf16.msra.mxu0 0
    %1683 = vmatprep.mubr.bf16.mxu0 0
    %1684 = vmatmul.mubr.bf16.gmra.mrb[0].mxu0 %v1649
    %v1685 = vpop.f32.mrb[0].mxu0
    %v1686 = vadd.f32 %v1636, %v1685
    %v1687 = vpop.f32.mrb[0].mxu0
    %v1688 = vadd.f32 %v1636, %v1687
    %v1689 = vpop.f32.mrb[0].mxu0
    %v1690 = vadd.f32 %v1641, %v1689
    %v1691 = vpop.f32.mrb[0].mxu0
    %v1692 = vadd.f32 %v1641, %v1691
    %1693 = vdwg.mxu0
    %1694 = vmatprep.subr.bf16.mxu0 %v1632
    %1695 = vmatpush1.bf16.msra.mxu0 %v1631
    %1696 = vmatprep.subr.bf16.mxu0 0
    %1697 = vmatpush1.bf16.msra.mxu0 0
    %1698 = vmatprep.subr.bf16.mxu0 0
    %1699 = vmatpush1.bf16.msra.mxu0 0
    %1700 = vmatprep.subr.bf16.mxu0 0
    %1701 = vmatpush1.bf16.msra.mxu0 0
    %1702 = vmatprep.subr.bf16.mxu0 0
    %1703 = vmatpush1.bf16.msra.mxu0 0
    %1704 = vmatprep.subr.bf16.mxu0 0
    %1705 = vmatpush1.bf16.msra.mxu0 0
    %1706 = vmatprep.subr.bf16.mxu0 0
    %1707 = vmatpush1.bf16.msra.mxu0 0
    %1708 = vmatprep.subr.bf16.mxu0 0
    %1709 = vmatpush1.bf16.msra.mxu0 0
    %1710 = vmatprep.subr.bf16.mxu0 0
    %1711 = vmatpush1.bf16.msra.mxu0 0
    %1712 = vmatprep.subr.bf16.mxu0 0
    %1713 = vmatpush1.bf16.msra.mxu0 0
    %1714 = vmatprep.subr.bf16.mxu0 0
    %1715 = vmatpush1.bf16.msra.mxu0 0
    %1716 = vmatprep.subr.bf16.mxu0 0
    %1717 = vmatpush1.bf16.msra.mxu0 0
    %1718 = vmatprep.subr.bf16.mxu0 0
    %1719 = vmatpush1.bf16.msra.mxu0 0
    %1720 = vmatprep.subr.bf16.mxu0 0
    %1721 = vmatpush1.bf16.msra.mxu0 0
    %1722 = vmatprep.subr.bf16.mxu0 0
    %1723 = vmatpush1.bf16.msra.mxu0 0
    %1724 = vmatprep.subr.bf16.mxu0 0
    %1725 = vmatpush1.bf16.msra.mxu0 0
    %1726 = vmatprep.mubr.bf16.mxu0 0
    %1727 = vmatmul.mubr.bf16.gmra.mrb[0].mxu0 %v1649
    %v1728 = vpop.f32.mrb[0].mxu0
    %v1729 = vadd.f32 %v1636, %v1728
    %v1730 = vpop.f32.mrb[0].mxu0
    %v1731 = vadd.f32 %v1636, %v1730
    %v1732 = vpop.f32.mrb[0].mxu0
    %v1733 = vadd.f32 %v1641, %v1732
    %v1734 = vpop.f32.mrb[0].mxu0
    %v1735 = vadd.f32 %v1641, %v1734
    %1736 = vdwg.mxu0
    %v1737 = vadd.f32 %v1686, %v53
    %v1738 = vadd.f32 %v1688, %v54
    %v1739 = vadd.f32 %v1729, %v55
    %v1740 = vadd.f32 %v1731, %v56
    %v1741 = vadd.f32 %v1690, %v57
    %v1742 = vadd.f32 %v1692, %v58
    %v1743 = vadd.f32 %v1733, %v59
    %v1744 = vadd.f32 %v1735, %v60
    %v1745 = vmax.f32 %v1737, 0.0
    %v1746 = vmax.f32 %v1738, 0.0
    %v1747 = vmax.f32 %v1739, 0.0
    %v1748 = vmax.f32 %v1740, 0.0
    %v1749 = vmax.f32 %v1741, 0.0
    %v1750 = vmax.f32 %v1742, 0.0
    %v1751 = vmax.f32 %v1743, 0.0
    %v1752 = vmax.f32 %v1744, 0.0
    %1753 = vst [vmem:[#allocation7] sm:$0xff] %v1745
    %1754 = vst [vmem:[#allocation7 + $0x8] sm:$0xff] %v1746
    %1755 = vst [vmem:[#allocation7 + $0x10] sm:$0xff] %v1747
    %1756 = vst [vmem:[#allocation7 + $0x18] sm:$0xff] %v1748
    %1757 = vst [vmem:[#allocation7 + $0x20] sm:$0xff] %v1749
    %1758 = vst [vmem:[#allocation7 + $0x28] sm:$0xff] %v1750
    %1759 = vst [vmem:[#allocation7 + $0x30] sm:$0xff] %v1751
    %1760 = vst [vmem:[#allocation7 + $0x38] sm:$0xff] %v1752
    // Predicated region
    $region34: #{tpu_custom_call.1} parent=1 // pred_check
      _
    $region35: #{tpu_custom_call.1} parent=1 // pred_check_branch
      %1762 = sbr.rel (0) target = $region37
    $region36: #{tpu_custom_call.1} parent=1 // pred_region
      %s1764 = ssub.s32 1024, 1024
      %1765 = vsyncadd [#allocation4], %s1764
      %s1766 = sshll.u32 [#allocation7], 4
      %s1767 = int_to_ptr.vmem [resolvable:$true] %s1766
      %1772 = dma.vmem_to_hbm [thread:$0]  %s1767, 1024, %s6, [#allocation4], 512, 512, 32
    $region37: #{tpu_custom_call.1} parent=1 // pred_fallthru
      _
    // Predicated region
    $region38: #{tpu_custom_call.1} parent=1 // pred_check
      _
    $region39: #{tpu_custom_call.1} parent=1 // pred_check_branch
      %1774 = sbr.rel (0) target = $region41
    $region40: #{tpu_custom_call.1} parent=1 // pred_region
      %1775 = dma.done [#allocation4], 1024
    $region41: #{tpu_custom_call.1} parent=1 // pred_fallthru
      _
    %1776 = vsyncpa [#allocation3], 1
    %1777 = vsyncpa [#allocation6], 1
    %1778 = vsyncpa [#allocation4], 1

</llo_original>
